<compile_context>
chip_gen: v5e
topology: v5e:2x2
jax: 0.10.0
libtpu: 0.0.40
codegen_flags: <defaults>
</compile_context>

<pallas_src>
import functools

import jax
import jax.numpy as jnp
from jax import lax
from jax.experimental import pallas as pl
from jax.experimental.pallas import tpu as pltpu


# ----------------------------------------------------------------------------
# Generation-dependent tuning (v5e/v6e: 128 MiB physical VMEM, v7x: 64 MiB)
# ----------------------------------------------------------------------------
def _vmem_capacity_bytes():
    try:
        info = pltpu.get_tpu_info()
        for attr in ("vmem_capacity_bytes", "vmem_bytes", "vmem_size_bytes"):
            v = getattr(info, attr, None)
            if isinstance(v, int) and v > 0:
                return v
    except Exception:
        pass
    return 64 * 1024 * 1024  # conservative fallback (v7x-sized)


_VMEM_PHYS = _vmem_capacity_bytes()
if _VMEM_PHYS >= 100 * 1024 * 1024:      # v5e / v6e
    _VMEM_LIMIT = 64 * 1024 * 1024
    _TM_CAP, _TN_CAP, _TK_CAP, _TL_CAP = 512, 512, 512, 256
else:                                     # v7x
    _VMEM_LIMIT = 32 * 1024 * 1024
    _TM_CAP, _TN_CAP, _TK_CAP, _TL_CAP = 256, 256, 512, 128


def _pick_tile(dim, cap, align):
    """Largest block size <= cap that evenly divides `dim`.

    Small dims are returned whole (a full-extent block is always legal);
    otherwise only multiples of `align` are considered so blocks stay
    (8, 128)-friendly."""
    if dim <= cap:
        return dim
    t = (cap // align) * align
    while t >= align:
        if dim % t == 0:
            return t
        t -= align
    return dim  # fall back to the full dimension (always a legal block)


# ----------------------------------------------------------------------------
# Kernel 1: tiled linear  y = x @ Wt + b   (Wt is the pre-transposed (Ein, Eout) weight)
# ----------------------------------------------------------------------------
def _linear_kernel(x_ref, w_ref, b_ref, o_ref, acc_ref):
    @pl.when(pl.program_id(2) == 0)
    def _():
        acc_ref[...] = jnp.zeros_like(acc_ref)

    acc_ref[...] += jnp.dot(x_ref[...], w_ref[...],
                            preferred_element_type=jnp.float32)

    @pl.when(pl.program_id(2) == pl.num_programs(2) - 1)
    def _():
        o_ref[...] = (acc_ref[...] + b_ref[...].astype(jnp.float32)).astype(o_ref.dtype)


def linear(x, w, b):
    """x: (M, Ein), w: (Eout, Ein) torch layout, b: (Eout,) -> (M, Eout)."""
    M, Ein = x.shape
    Eout = w.shape[0]
    wt = w.T                          # one-time wrapper-side transpose (layout plumbing)
    tm = _pick_tile(M, _TM_CAP, 8)
    tn = _pick_tile(Eout, _TN_CAP, 128)
    tk = _pick_tile(Ein, _TK_CAP, 128)
    grid = (M // tm, Eout // tn, Ein // tk)
    return pl.pallas_call(
        _linear_kernel,
        grid=grid,
        in_specs=[
            pl.BlockSpec((tm, tk), lambda i, j, kk: (i, kk)),
            pl.BlockSpec((tk, tn), lambda i, j, kk: (kk, j)),
            pl.BlockSpec((1, tn), lambda i, j, kk: (0, j)),
        ],
        out_specs=pl.BlockSpec((tm, tn), lambda i, j, kk: (i, j)),
        out_shape=jax.ShapeDtypeStruct((M, Eout), x.dtype),
        scratch_shapes=[pltpu.VMEM((tm, tn), jnp.float32)],
        compiler_params=pltpu.CompilerParams(
            dimension_semantics=("parallel", "parallel", "arbitrary"),
            vmem_limit_bytes=_VMEM_LIMIT,
        ),
    )(x, wt, b.reshape(1, Eout))


# ----------------------------------------------------------------------------
# Kernel 2: attention — grid over (batch N, L tiles), lane-dense (L, E)/(S, E) slabs
# ----------------------------------------------------------------------------
def _attn_kernel(q_ref, k_ref, v_ref, o_ref, w_ref, *, heads, scale):
    tl, E = q_ref.shape
    S = k_ref.shape[0]
    Dh = E // heads

    # Keep matmul operands in the input dtype; f32 accumulation via
    # preferred_element_type. Scale applied to q (the smaller operand).
    q = q_ref[...] * scale                                   # (tl, E)
    k = k_ref[...]                                           # (S, E)
    v = v_ref[...]                                           # (S, E)

    qh = q.reshape(tl, heads, Dh)
    kh = k.reshape(S, heads, Dh)
    vh = v.reshape(S, heads, Dh)

    # Per-head scores, f32 accumulation on the MXU.
    s = jnp.einsum("lhd,shd->hls", qh, kh,
                   preferred_element_type=jnp.float32)       # (H, tl, S) f32

    # Numerically stable softmax in f32; exact reciprocal for torch parity.
    m = jnp.max(s, axis=-1, keepdims=True)
    p = jnp.exp(s - m)
    inv = pl.reciprocal(jnp.sum(p, axis=-1, keepdims=True), approx=False)
    p = p * inv                                              # (H, tl, S) f32

    # PV matmul back in the input dtype.
    ctx = jnp.einsum("hls,shd->lhd", p.astype(v.dtype), vh,
                     preferred_element_type=jnp.float32)     # (tl, H, Dh)
    o_ref[...] = ctx.reshape(tl, E).astype(o_ref.dtype)      # lane-dense store

    # Fused over-heads average (torch default average_attn_weights=True),
    # emitted in the input dtype (torch parity).
    w_ref[...] = (jnp.sum(p, axis=0) * (1.0 / heads)).astype(w_ref.dtype)


def multihead_attention_core(q, k, v, heads, scale):
    """q: (N, L, E), k/v: (N, S, E) -> ctx (N, L, E), weights (N, L, S)."""
    N, L, E = q.shape
    S = k.shape[1]
    tl = _pick_tile(L, _TL_CAP, 8)
    kernel = functools.partial(_attn_kernel, heads=heads, scale=scale)
    return pl.pallas_call(
        kernel,
        grid=(N, L // tl),
        in_specs=[
            pl.BlockSpec((None, tl, E), lambda n, li: (n, li, 0)),
            pl.BlockSpec((None, S, E), lambda n, li: (n, 0, 0)),
            pl.BlockSpec((None, S, E), lambda n, li: (n, 0, 0)),
        ],
        out_specs=(
            pl.BlockSpec((None, tl, E), lambda n, li: (n, li, 0)),
            pl.BlockSpec((None, tl, S), lambda n, li: (n, li, 0)),
        ),
        out_shape=(
            jax.ShapeDtypeStruct((N, L, E), q.dtype),
            jax.ShapeDtypeStruct((N, L, S), q.dtype),
        ),
        compiler_params=pltpu.CompilerParams(
            dimension_semantics=("parallel", "parallel"),
            vmem_limit_bytes=_VMEM_LIMIT,
        ),
    )(q, k, v)


# ----------------------------------------------------------------------------
# Kernel 3: out_proj + residual + LayerNorm, fused, with tiled E reduction
# ----------------------------------------------------------------------------
def _out_ln_kernel(ctx_ref, wo_ref, bo_ref, res_ref, g_ref, b_ref, o_ref,
                   acc_ref, *, eps):
    @pl.when(pl.program_id(1) == 0)
    def _():
        acc_ref[...] = jnp.zeros_like(acc_ref)

    acc_ref[...] += jnp.dot(ctx_ref[...], wo_ref[...],
                            preferred_element_type=jnp.float32)

    @pl.when(pl.program_id(1) == pl.num_programs(1) - 1)
    def _():
        x = (acc_ref[...] + bo_ref[...].astype(jnp.float32)
             + res_ref[...].astype(jnp.float32))
        mean = jnp.mean(x, axis=-1, keepdims=True)
        var = jnp.mean(jnp.square(x - mean), axis=-1, keepdims=True)
        xn = (x - mean) * lax.rsqrt(var + eps)
        o_ref[...] = (xn * g_ref[...].astype(jnp.float32)
                      + b_ref[...].astype(jnp.float32)).astype(o_ref.dtype)


def out_proj_residual_layernorm(ctx2d, wo, bo, residual2d, gamma, beta, eps=1e-5):
    M, E = ctx2d.shape
    wo_t = wo.T                       # one-time wrapper-side transpose: (Ein=E, Eout=E)
    tm = _pick_tile(M, _TM_CAP, 8)
    tk = _pick_tile(E, _TK_CAP, 128)
    kernel = functools.partial(_out_ln_kernel, eps=eps)
    return pl.pallas_call(
        kernel,
        grid=(M // tm, E // tk),
        in_specs=[
            pl.BlockSpec((tm, tk), lambda i, kk: (i, kk)),
            pl.BlockSpec((tk, E), lambda i, kk: (kk, 0)),
            pl.BlockSpec((1, E), lambda i, kk: (0, 0)),
            pl.BlockSpec((tm, E), lambda i, kk: (i, 0)),
            pl.BlockSpec((1, E), lambda i, kk: (0, 0)),
            pl.BlockSpec((1, E), lambda i, kk: (0, 0)),
        ],
        out_specs=pl.BlockSpec((tm, E), lambda i, kk: (i, 0)),
        out_shape=jax.ShapeDtypeStruct((M, E), ctx2d.dtype),
        scratch_shapes=[pltpu.VMEM((tm, E), jnp.float32)],
        compiler_params=pltpu.CompilerParams(
            dimension_semantics=("parallel", "arbitrary"),
            vmem_limit_bytes=_VMEM_LIMIT,
        ),
    )(ctx2d, wo_t, bo.reshape(1, E), residual2d,
      gamma.reshape(1, E), beta.reshape(1, E))


# ----------------------------------------------------------------------------
# Full module forward
# ----------------------------------------------------------------------------
def init_params(key, embed_size):
    k1, k2, k3, k4 = jax.random.split(key, 4)
    return {
        "in_proj_weight": 0.05 * jax.random.normal(k1, (3 * embed_size, embed_size), jnp.float32),
        "in_proj_bias": 0.01 * jax.random.normal(k2, (3 * embed_size,), jnp.float32),
        "out_proj_weight": 0.05 * jax.random.normal(k3, (embed_size, embed_size), jnp.float32),
        "out_proj_bias": 0.01 * jax.random.normal(k4, (embed_size,), jnp.float32),
        "ln_gamma": jnp.ones((embed_size,), jnp.float32),   # torch LayerNorm default
        "ln_beta": jnp.zeros((embed_size,), jnp.float32),
    }


def _project_qkv(q2d, k2d, v2d, params, E, mode):
    w = params["in_proj_weight"]      # (3E, E) torch layout
    b = params["in_proj_bias"]        # (3E,)
    if mode == "qkv":
        # Fused single projection: one pallas_call, one HBM read of the activations.
        qkv = linear(q2d, w, b)                              # (M, 3E)
        return qkv[:, :E], qkv[:, E:2 * E], qkv[:, 2 * E:]
    if mode == "kv":
        q = linear(q2d, w[:E], b[:E])
        kv = linear(k2d, w[E:], b[E:])                       # fused K/V projection
        return q, kv[:, :E], kv[:, E:]
    return (linear(q2d, w[:E], b[:E]),
            linear(k2d, w[E:2 * E], b[E:2 * E]),
            linear(v2d, w[2 * E:], b[2 * E:]))


@functools.partial(jax.jit, static_argnames=("heads", "mode"))
def _self_attention_impl(value, key, query, params, heads, mode):
    L, N, E = query.shape
    S = key.shape[0]
    H = heads
    Dh = E // H
    scale = 1.0 / float(Dh) ** 0.5

    # One wrapper-side transpose of activations to batch-first (lane-dense slabs).
    q_bf = jnp.transpose(query, (1, 0, 2))                   # (N, L, E)
    k_bf = q_bf if mode == "qkv" else jnp.transpose(key, (1, 0, 2))
    v_bf = k_bf if mode in ("qkv", "kv") else jnp.transpose(value, (1, 0, 2))

    q2d = q_bf.reshape(N * L, E)
    k2d = k_bf.reshape(N * S, E)
    v2d = v_bf.reshape(N * S, E)

    # Input projections (fused when possible).
    qp, kp, vp = _project_qkv(q2d, k2d, v2d, params, E, mode)

    # Attention on lane-dense (N, L, E)/(N, S, E) slabs; head split inside the kernel.
    ctx, attention_weights = multihead_attention_core(
        qp.reshape(N, L, E), kp.reshape(N, S, E), vp.reshape(N, S, E), H, scale)

    # out_proj + residual (raw query rows) + LayerNorm, fused.
    out2d = out_proj_residual_layernorm(
        ctx.reshape(N * L, E), params["out_proj_weight"], params["out_proj_bias"],
        q2d, params["ln_gamma"], params["ln_beta"])

    # One wrapper-side transpose back to (L, N, E).
    output = jnp.transpose(out2d.reshape(N, L, E), (1, 0, 2))
    return output, attention_weights


def self_attention_forward(value, key, query, params, heads):
    """Mirrors SelfAttention.forward(value, key, query, mask=None)."""
    if (query is key) and (key is value):
        mode = "qkv"
    elif key is value:
        mode = "kv"
    else:
        mode = "none"
    return _self_attention_impl(value, key, query, params, heads, mode)


# ----------------------------------------------------------------------------
# Pure-JAX reference (for a sanity check in __main__)
# ----------------------------------------------------------------------------
def _reference(value, key, query, params, heads, eps=1e-5):
    L, N, E = query.shape
    S = key.shape[0]
    H = heads
    Dh = E // H
    w, b = params["in_proj_weight"], params["in_proj_bias"]
    q = jnp.einsum("lne,oe->lno", query, w[:E], precision="highest") + b[:E]
    k = jnp.einsum("lne,oe->lno", key, w[E:2 * E], precision="highest") + b[E:2 * E]
    v = jnp.einsum("lne,oe->lno", value, w[2 * E:], precision="highest") + b[2 * E:]
    qh = q.reshape(L, N, H, Dh).transpose(1, 2, 0, 3)
    kh = k.reshape(S, N, H, Dh).transpose(1, 2, 0, 3)
    vh = v.reshape(S, N, H, Dh).transpose(1, 2, 0, 3)
    s = jnp.einsum("nhld,nhsd->nhls", qh, kh, precision="highest") / (Dh ** 0.5)
    p = jax.nn.softmax(s, axis=-1)
    ctx = jnp.einsum("nhls,nhsd->nhld", p, vh, precision="highest")
    ctx = ctx.transpose(2, 0, 1, 3).reshape(L, N, E)
    attn_out = jnp.einsum("lne,oe->lno", ctx, params["out_proj_weight"],
                          precision="highest") + params["out_proj_bias"]
    x = attn_out + query
    mean = x.mean(-1, keepdims=True)
    var = ((x - mean) ** 2).mean(-1, keepdims=True)
    out = (x - mean) / jnp.sqrt(var + eps) * params["ln_gamma"] + params["ln_beta"]
    return out, p.mean(axis=1)


def _assert_close(a, b, tol, name):
    err = float(jnp.max(jnp.abs(a - b)))
    assert err < tol, f"{name} mismatch: max abs err {err}"


if __name__ == "__main__":
    embed_size, heads = 32, 4
    L, S, N = 8, 8, 2      # tgt_len, src_len, batch

    root = jax.random.PRNGKey(0)
    kp, kq, kk, kv = jax.random.split(root, 4)
    params = init_params(kp, embed_size)

    query = jax.random.normal(kq, (L, N, embed_size), jnp.float32)
    key = jax.random.normal(kk, (S, N, embed_size), jnp.float32)
    value = jax.random.normal(kv, (S, N, embed_size), jnp.float32)

    # Cross-attention style call (distinct q/k/v -> three projection kernels).
    out, attn_w = self_attention_forward(value, key, query, params, heads)
    jax.block_until_ready((out, attn_w))
    assert out.shape == (L, N, embed_size)
    assert attn_w.shape == (N, L, S)
    ref_out, ref_w = _reference(value, key, query, params, heads)
    _assert_close(out, ref_out, 2e-2, "output")
    _assert_close(attn_w, ref_w, 2e-2, "attention_weights")

    # Pure self-attention call (query is key is value -> fused QKV projection path).
    out2, attn_w2 = self_attention_forward(query, query, query, params, heads)
    jax.block_until_ready((out2, attn_w2))
    assert out2.shape == (L, N, embed_size)
    assert attn_w2.shape == (N, L, L)
    ref_out2, ref_w2 = _reference(query, query, query, params, heads)
    _assert_close(out2, ref_out2, 2e-2, "output (fused qkv)")
    _assert_close(attn_w2, ref_w2, 2e-2, "attention_weights (fused qkv)")

    print("KERNEL_OK")
</pallas_src>

<mosaic_0001>
module attributes {stable_mosaic.version = 11 : i64} {
  func.func @_linear_kernel(%arg0: i32, %arg1: i32, %arg2: i32, %arg3: memref<16x32xf32, #tpu.memory_space<vmem>>, %arg4: memref<32x32xf32, #tpu.memory_space<vmem>>, %arg5: memref<1x32xf32, #tpu.memory_space<vmem>>, %arg6: memref<16x32xf32, #tpu.memory_space<vmem>>, %arg7: memref<16x32xf32, #tpu.memory_space<vmem>>) attributes {dimension_semantics = [#tpu.dimension_semantics<parallel>, #tpu.dimension_semantics<parallel>, #tpu.dimension_semantics<arbitrary>], iteration_bounds = array<i64: 1, 1, 1>, scalar_prefetch = 0 : i64, scratch_operands = 1 : i64, tpu.core_type = #tpu.core_type<tc>, window_params = [{transform_indices = @transform_0, window_bounds = array<i64: 16, 32>}, {transform_indices = @transform_1, window_bounds = array<i64: 32, 32>}, {transform_indices = @transform_2, window_bounds = array<i64: 1, 32>}, {transform_indices = @transform_3, window_bounds = array<i64: 16, 32>}]} {
    %c0_i32 = arith.constant 0 : i32
    %0 = arith.cmpi eq, %arg2, %c0_i32 : i32
    %1 = arith.extui %0 : i1 to i32
    %c0_i32_0 = arith.constant 0 : i32
    %2 = arith.cmpi ne, %1, %c0_i32_0 : i32
    scf.if %2 {
      %cst_10 = arith.constant 0.000000e+00 : f32
      %12 = vector.broadcast %cst_10 : f32 to vector<16x32xf32>
      %c0_11 = arith.constant 0 : index
      %c0_12 = arith.constant 0 : index
      %13 = vector.load %arg7[%c0_11, %c0_12] : memref<16x32xf32, #tpu.memory_space<vmem>>, vector<16x32xf32>
      tpu.vector_store %arg7[%c0_11, %c0_12], %12 {strides = array<i32>} : memref<16x32xf32, #tpu.memory_space<vmem>>, vector<16x32xf32>,
    } else {
    }
    %c0 = arith.constant 0 : index
    %c0_1 = arith.constant 0 : index
    %3 = vector.load %arg7[%c0, %c0_1] : memref<16x32xf32, #tpu.memory_space<vmem>>, vector<16x32xf32>
    %c0_2 = arith.constant 0 : index
    %c0_3 = arith.constant 0 : index
    %4 = vector.load %arg3[%c0_2, %c0_3] : memref<16x32xf32, #tpu.memory_space<vmem>>, vector<16x32xf32>
    %c0_4 = arith.constant 0 : index
    %c0_5 = arith.constant 0 : index
    %5 = vector.load %arg4[%c0_4, %c0_5] : memref<32x32xf32, #tpu.memory_space<vmem>>, vector<32x32xf32>
    %cst = arith.constant dense<0.000000e+00> : vector<16x32xf32>
    %6 = tpu.matmul %4, %5, %cst {dimension_numbers = #tpu.dot_dimension_numbers<[1], [0], [0], [1], [0, 0, 1, 1], [], []>} : vector<16x32xf32>, vector<32x32xf32>, vector<16x32xf32> -> vector<16x32xf32>
    %7 = arith.addf %3, %6 : vector<16x32xf32>
    %c0_6 = arith.constant 0 : index
    %c0_7 = arith.constant 0 : index
    %8 = vector.load %arg7[%c0_6, %c0_7] : memref<16x32xf32, #tpu.memory_space<vmem>>, vector<16x32xf32>
    tpu.vector_store %arg7[%c0_6, %c0_7], %7 {strides = array<i32>} : memref<16x32xf32, #tpu.memory_space<vmem>>, vector<16x32xf32>,
    %c0_i32_8 = arith.constant 0 : i32
    %9 = arith.cmpi eq, %arg2, %c0_i32_8 : i32
    %10 = arith.extui %9 : i1 to i32
    %c0_i32_9 = arith.constant 0 : i32
    %11 = arith.cmpi ne, %10, %c0_i32_9 : i32
    scf.if %11 {
      %c0_10 = arith.constant 0 : index
      %c0_11 = arith.constant 0 : index
      %12 = vector.load %arg7[%c0_10, %c0_11] : memref<16x32xf32, #tpu.memory_space<vmem>>, vector<16x32xf32>
      %c0_12 = arith.constant 0 : index
      %c0_13 = arith.constant 0 : index
      %13 = vector.load %arg5[%c0_12, %c0_13] : memref<1x32xf32, #tpu.memory_space<vmem>>, vector<1x32xf32>
      %14 = vector.broadcast %13 : vector<1x32xf32> to vector<16x32xf32>
      %15 = arith.addf %12, %14 : vector<16x32xf32>
      %c0_14 = arith.constant 0 : index
      %c0_15 = arith.constant 0 : index
      %16 = vector.load %arg6[%c0_14, %c0_15] : memref<16x32xf32, #tpu.memory_space<vmem>>, vector<16x32xf32>
      tpu.vector_store %arg6[%c0_14, %c0_15], %15 {strides = array<i32>} : memref<16x32xf32, #tpu.memory_space<vmem>>, vector<16x32xf32>,
    } else {
    }
    return
  }
  func.func @transform_0(%arg0: i32, %arg1: i32, %arg2: i32) -> (i32, i32) {
    %c0_i32 = arith.constant 0 : i32
    return %arg0, %arg2 : i32, i32
  }
  func.func @transform_1(%arg0: i32, %arg1: i32, %arg2: i32) -> (i32, i32) {
    %c0_i32 = arith.constant 0 : i32
    return %arg2, %arg1 : i32, i32
  }
  func.func @transform_2(%arg0: i32, %arg1: i32, %arg2: i32) -> (i32, i32) {
    %c0_i32 = arith.constant 0 : i32
    %c0_i32_0 = arith.constant 0 : i32
    return %c0_i32, %arg1 : i32, i32
  }
  func.func @transform_3(%arg0: i32, %arg1: i32, %arg2: i32) -> (i32, i32) {
    %c0_i32 = arith.constant 0 : i32
    return %arg0, %arg1 : i32, i32
  }
}

module attributes {stable_mosaic.version = 11 : i64} {
  func.func @_attn_kernel(%arg0: i32, %arg1: i32, %arg2: memref<1x8x32xf32, #tpu.memory_space<vmem>>, %arg3: memref<1x8x32xf32, #tpu.memory_space<vmem>>, %arg4: memref<1x8x32xf32, #tpu.memory_space<vmem>>, %arg5: memref<1x8x32xf32, #tpu.memory_space<vmem>>, %arg6: memref<1x8x8xf32, #tpu.memory_space<vmem>>) attributes {dimension_semantics = [#tpu.dimension_semantics<parallel>, #tpu.dimension_semantics<parallel>], iteration_bounds = array<i64: 2, 1>, scalar_prefetch = 0 : i64, scratch_operands = 0 : i64, tpu.core_type = #tpu.core_type<tc>, window_params = [{transform_indices = @transform_0, window_bounds = array<i64: 1, 8, 32>}, {transform_indices = @transform_1, window_bounds = array<i64: 1, 8, 32>}, {transform_indices = @transform_2, window_bounds = array<i64: 1, 8, 32>}, {transform_indices = @transform_3, window_bounds = array<i64: 1, 8, 32>}, {transform_indices = @transform_4, window_bounds = array<i64: 1, 8, 8>}]} {
    %c0 = arith.constant 0 : index
    %c0_0 = arith.constant 0 : index
    %c0_1 = arith.constant 0 : index
    %0 = vector.load %arg2[%c0, %c0_0, %c0_1] : memref<1x8x32xf32, #tpu.memory_space<vmem>>, vector<1x8x32xf32>
    %1 = vector.shape_cast %0 : vector<1x8x32xf32> to vector<8x32xf32>
    %cst = arith.constant 0.353553385 : f32
    %2 = vector.broadcast %cst : f32 to vector<8x32xf32>
    %3 = arith.mulf %1, %2 : vector<8x32xf32>
    %c0_2 = arith.constant 0 : index
    %c0_3 = arith.constant 0 : index
    %c0_4 = arith.constant 0 : index
    %4 = vector.load %arg3[%c0_2, %c0_3, %c0_4] : memref<1x8x32xf32, #tpu.memory_space<vmem>>, vector<1x8x32xf32>
    %5 = vector.shape_cast %4 : vector<1x8x32xf32> to vector<8x32xf32>
    %c0_5 = arith.constant 0 : index
    %c0_6 = arith.constant 0 : index
    %c0_7 = arith.constant 0 : index
    %6 = vector.load %arg4[%c0_5, %c0_6, %c0_7] : memref<1x8x32xf32, #tpu.memory_space<vmem>>, vector<1x8x32xf32>
    %7 = vector.shape_cast %6 : vector<1x8x32xf32> to vector<8x32xf32>
    %8 = vector.shape_cast %3 : vector<8x32xf32> to vector<8x4x8xf32>
    %9 = vector.shape_cast %5 : vector<8x32xf32> to vector<8x4x8xf32>
    %10 = vector.shape_cast %7 : vector<8x32xf32> to vector<8x4x8xf32>
    "tpu.trace_start"() <{level = 10 : i32, message = "lhd,shd->hls"}> : () -> ()
    %cst_8 = arith.constant dense<0.000000e+00> : vector<4x8x8xf32>
    %11 = tpu.matmul %8, %9, %cst_8 {dimension_numbers = #tpu.dot_dimension_numbers<[2], [2], [0], [0], [0, 1, 0, 0, 1, 0], [1], [1]>} : vector<8x4x8xf32>, vector<8x4x8xf32>, vector<4x8x8xf32> -> vector<4x8x8xf32>
    "tpu.trace_stop"() : () -> ()
    %cst_9 = arith.constant dense<0xFF800000> : vector<4x8xf32>
    %12 = vector.multi_reduction <maximumf>, %11, %cst_9 [2] : vector<4x8x8xf32> to vector<4x8xf32>
    %13 = vector.shape_cast %12 : vector<4x8xf32> to vector<4x8x1xf32>
    %14 = vector.broadcast %13 : vector<4x8x1xf32> to vector<4x8x8xf32>
    %15 = arith.subf %11, %14 : vector<4x8x8xf32>
    %16 = math.exp %15 : vector<4x8x8xf32>
    %cst_10 = arith.constant dense<0.000000e+00> : vector<4x8xf32>
    %17 = vector.multi_reduction <add>, %16, %cst_10 [2] : vector<4x8x8xf32> to vector<4x8xf32>
    %18 = vector.shape_cast %17 : vector<4x8xf32> to vector<4x8x1xf32>
    %19 = tpu.reciprocal %18 : vector<4x8x1xf32> -> vector<4x8x1xf32>
    %20 = vector.broadcast %19 : vector<4x8x1xf32> to vector<4x8x8xf32>
    %21 = arith.mulf %16, %20 : vector<4x8x8xf32>
    "tpu.trace_start"() <{level = 10 : i32, message = "hls,shd->lhd"}> : () -> ()
    %cst_11 = arith.constant dense<0.000000e+00> : vector<4x8x8xf32>
    %22 = tpu.matmul %10, %21, %cst_11 {dimension_numbers = #tpu.dot_dimension_numbers<[0], [2], [2], [1], [0, 1, 0, 2, 1, 1], [1], [0]>} : vector<8x4x8xf32>, vector<4x8x8xf32>, vector<4x8x8xf32> -> vector<4x8x8xf32>
    %23 = tpu.transpose %22, [2, 0, 1] : vector<4x8x8xf32> -> vector<8x4x8xf32>
    "tpu.trace_stop"() : () -> ()
    %24 = vector.shape_cast %23 : vector<8x4x8xf32> to vector<8x32xf32>
    %c0_12 = arith.constant 0 : index
    %c0_13 = arith.constant 0 : index
    %c0_14 = arith.constant 0 : index
    %25 = vector.load %arg5[%c0_12, %c0_13, %c0_14] : memref<1x8x32xf32, #tpu.memory_space<vmem>>, vector<1x8x32xf32>
    %26 = vector.shape_cast %25 : vector<1x8x32xf32> to vector<8x32xf32>
    %27 = vector.shape_cast %24 : vector<8x32xf32> to vector<1x8x32xf32>
    tpu.vector_store %arg5[%c0_12, %c0_13, %c0_14], %27 {strides = array<i32>} : memref<1x8x32xf32, #tpu.memory_space<vmem>>, vector<1x8x32xf32>,
    %cst_15 = arith.constant dense<0.000000e+00> : vector<8x8xf32>
    %28 = vector.multi_reduction <add>, %21, %cst_15 [0] : vector<4x8x8xf32> to vector<8x8xf32>
    %cst_16 = arith.constant 2.500000e-01 : f32
    %29 = vector.broadcast %cst_16 : f32 to vector<8x8xf32>
    %30 = arith.mulf %28, %29 : vector<8x8xf32>
    %c0_17 = arith.constant 0 : index
    %c0_18 = arith.constant 0 : index
    %c0_19 = arith.constant 0 : index
    %31 = vector.load %arg6[%c0_17, %c0_18, %c0_19] : memref<1x8x8xf32, #tpu.memory_space<vmem>>, vector<1x8x8xf32>
    %32 = vector.shape_cast %31 : vector<1x8x8xf32> to vector<8x8xf32>
    %33 = vector.shape_cast %30 : vector<8x8xf32> to vector<1x8x8xf32>
    tpu.vector_store %arg6[%c0_17, %c0_18, %c0_19], %33 {strides = array<i32>} : memref<1x8x8xf32, #tpu.memory_space<vmem>>, vector<1x8x8xf32>,
    return
  }
  func.func @transform_0(%arg0: i32, %arg1: i32) -> (i32, i32, i32) {
    %c0_i32 = arith.constant 0 : i32
    %c0_i32_0 = arith.constant 0 : i32
    return %arg0, %arg1, %c0_i32 : i32, i32, i32
  }
  func.func @transform_1(%arg0: i32, %arg1: i32) -> (i32, i32, i32) {
    %c0_i32 = arith.constant 0 : i32
    %c0_i32_0 = arith.constant 0 : i32
    %c0_i32_1 = arith.constant 0 : i32
    return %arg0, %c0_i32, %c0_i32_0 : i32, i32, i32
  }
  func.func @transform_2(%arg0: i32, %arg1: i32) -> (i32, i32, i32) {
    %c0_i32 = arith.constant 0 : i32
    %c0_i32_0 = arith.constant 0 : i32
    %c0_i32_1 = arith.constant 0 : i32
    return %arg0, %c0_i32, %c0_i32_0 : i32, i32, i32
  }
  func.func @transform_3(%arg0: i32, %arg1: i32) -> (i32, i32, i32) {
    %c0_i32 = arith.constant 0 : i32
    %c0_i32_0 = arith.constant 0 : i32
    return %arg0, %arg1, %c0_i32 : i32, i32, i32
  }
  func.func @transform_4(%arg0: i32, %arg1: i32) -> (i32, i32, i32) {
    %c0_i32 = arith.constant 0 : i32
    %c0_i32_0 = arith.constant 0 : i32
    return %arg0, %arg1, %c0_i32 : i32, i32, i32
  }
}

module attributes {stable_mosaic.version = 11 : i64} {
  func.func @_out_ln_kernel(%arg0: i32, %arg1: i32, %arg2: memref<16x32xf32, #tpu.memory_space<vmem>>, %arg3: memref<32x32xf32, #tpu.memory_space<vmem>>, %arg4: memref<1x32xf32, #tpu.memory_space<vmem>>, %arg5: memref<16x32xf32, #tpu.memory_space<vmem>>, %arg6: memref<1x32xf32, #tpu.memory_space<vmem>>, %arg7: memref<1x32xf32, #tpu.memory_space<vmem>>, %arg8: memref<16x32xf32, #tpu.memory_space<vmem>>, %arg9: memref<16x32xf32, #tpu.memory_space<vmem>>) attributes {dimension_semantics = [#tpu.dimension_semantics<parallel>, #tpu.dimension_semantics<arbitrary>], iteration_bounds = array<i64: 1, 1>, scalar_prefetch = 0 : i64, scratch_operands = 1 : i64, tpu.core_type = #tpu.core_type<tc>, window_params = [{transform_indices = @transform_0, window_bounds = array<i64: 16, 32>}, {transform_indices = @transform_1, window_bounds = array<i64: 32, 32>}, {pipeline_mode = #tpu.pipeline_mode<synchronous>, transform_indices = @transform_2, window_bounds = array<i64: 1, 32>}, {transform_indices = @transform_3, window_bounds = array<i64: 16, 32>}, {pipeline_mode = #tpu.pipeline_mode<synchronous>, transform_indices = @transform_4, window_bounds = array<i64: 1, 32>}, {pipeline_mode = #tpu.pipeline_mode<synchronous>, transform_indices = @transform_5, window_bounds = array<i64: 1, 32>}, {transform_indices = @transform_6, window_bounds = array<i64: 16, 32>}]} {
    %c0_i32 = arith.constant 0 : i32
    %0 = arith.cmpi eq, %arg1, %c0_i32 : i32
    %1 = arith.extui %0 : i1 to i32
    %c0_i32_0 = arith.constant 0 : i32
    %2 = arith.cmpi ne, %1, %c0_i32_0 : i32
    scf.if %2 {
      %cst_10 = arith.constant 0.000000e+00 : f32
      %12 = vector.broadcast %cst_10 : f32 to vector<16x32xf32>
      %c0_11 = arith.constant 0 : index
      %c0_12 = arith.constant 0 : index
      %13 = vector.load %arg9[%c0_11, %c0_12] : memref<16x32xf32, #tpu.memory_space<vmem>>, vector<16x32xf32>
      tpu.vector_store %arg9[%c0_11, %c0_12], %12 {strides = array<i32>} : memref<16x32xf32, #tpu.memory_space<vmem>>, vector<16x32xf32>,
    } else {
    }
    %c0 = arith.constant 0 : index
    %c0_1 = arith.constant 0 : index
    %3 = vector.load %arg9[%c0, %c0_1] : memref<16x32xf32, #tpu.memory_space<vmem>>, vector<16x32xf32>
    %c0_2 = arith.constant 0 : index
    %c0_3 = arith.constant 0 : index
    %4 = vector.load %arg2[%c0_2, %c0_3] : memref<16x32xf32, #tpu.memory_space<vmem>>, vector<16x32xf32>
    %c0_4 = arith.constant 0 : index
    %c0_5 = arith.constant 0 : index
    %5 = vector.load %arg3[%c0_4, %c0_5] : memref<32x32xf32, #tpu.memory_space<vmem>>, vector<32x32xf32>
    %cst = arith.constant dense<0.000000e+00> : vector<16x32xf32>
    %6 = tpu.matmul %4, %5, %cst {dimension_numbers = #tpu.dot_dimension_numbers<[1], [0], [0], [1], [0, 0, 1, 1], [], []>} : vector<16x32xf32>, vector<32x32xf32>, vector<16x32xf32> -> vector<16x32xf32>
    %7 = arith.addf %3, %6 : vector<16x32xf32>
    %c0_6 = arith.constant 0 : index
    %c0_7 = arith.constant 0 : index
    %8 = vector.load %arg9[%c0_6, %c0_7] : memref<16x32xf32, #tpu.memory_space<vmem>>, vector<16x32xf32>
    tpu.vector_store %arg9[%c0_6, %c0_7], %7 {strides = array<i32>} : memref<16x32xf32, #tpu.memory_space<vmem>>, vector<16x32xf32>,
    %c0_i32_8 = arith.constant 0 : i32
    %9 = arith.cmpi eq, %arg1, %c0_i32_8 : i32
    %10 = arith.extui %9 : i1 to i32
    %c0_i32_9 = arith.constant 0 : i32
    %11 = arith.cmpi ne, %10, %c0_i32_9 : i32
    scf.if %11 {
      %c0_10 = arith.constant 0 : index
      %c0_11 = arith.constant 0 : index
      %12 = vector.load %arg9[%c0_10, %c0_11] : memref<16x32xf32, #tpu.memory_space<vmem>>, vector<16x32xf32>
      %c0_12 = arith.constant 0 : index
      %c0_13 = arith.constant 0 : index
      %13 = vector.load %arg4[%c0_12, %c0_13] : memref<1x32xf32, #tpu.memory_space<vmem>>, vector<1x32xf32>
      %14 = vector.broadcast %13 : vector<1x32xf32> to vector<16x32xf32>
      %15 = arith.addf %12, %14 : vector<16x32xf32>
      %c0_14 = arith.constant 0 : index
      %c0_15 = arith.constant 0 : index
      %16 = vector.load %arg5[%c0_14, %c0_15] : memref<16x32xf32, #tpu.memory_space<vmem>>, vector<16x32xf32>
      %17 = arith.addf %15, %16 : vector<16x32xf32>
      %cst_16 = arith.constant dense<0.000000e+00> : vector<16xf32>
      %18 = vector.multi_reduction <add>, %17, %cst_16 [1] : vector<16x32xf32> to vector<16xf32>
      %19 = vector.shape_cast %18 : vector<16xf32> to vector<16x1xf32>
      %cst_17 = arith.constant 3.200000e+01 : f32
      %20 = vector.broadcast %cst_17 : f32 to vector<16x1xf32>
      %21 = arith.divf %19, %20 : vector<16x1xf32>
      %22 = vector.broadcast %21 : vector<16x1xf32> to vector<16x32xf32>
      %23 = arith.subf %17, %22 : vector<16x32xf32>
      %24 = arith.mulf %23, %23 : vector<16x32xf32>
      %cst_18 = arith.constant dense<0.000000e+00> : vector<16xf32>
      %25 = vector.multi_reduction <add>, %24, %cst_18 [1] : vector<16x32xf32> to vector<16xf32>
      %26 = vector.shape_cast %25 : vector<16xf32> to vector<16x1xf32>
      %cst_19 = arith.constant 3.200000e+01 : f32
      %27 = vector.broadcast %cst_19 : f32 to vector<16x1xf32>
      %28 = arith.divf %26, %27 : vector<16x1xf32>
      %29 = vector.broadcast %21 : vector<16x1xf32> to vector<16x32xf32>
      %30 = arith.subf %17, %29 : vector<16x32xf32>
      %cst_20 = arith.constant 9.99999974E-6 : f32
      %31 = vector.broadcast %cst_20 : f32 to vector<16x1xf32>
      %32 = arith.addf %28, %31 : vector<16x1xf32>
      %33 = math.rsqrt %32 : vector<16x1xf32>
      %34 = vector.broadcast %33 : vector<16x1xf32> to vector<16x32xf32>
      %35 = arith.mulf %30, %34 : vector<16x32xf32>
      %c0_21 = arith.constant 0 : index
      %c0_22 = arith.constant 0 : index
      %36 = vector.load %arg6[%c0_21, %c0_22] : memref<1x32xf32, #tpu.memory_space<vmem>>, vector<1x32xf32>
      %37 = vector.broadcast %36 : vector<1x32xf32> to vector<16x32xf32>
      %38 = arith.mulf %35, %37 : vector<16x32xf32>
      %c0_23 = arith.constant 0 : index
      %c0_24 = arith.constant 0 : index
      %39 = vector.load %arg7[%c0_23, %c0_24] : memref<1x32xf32, #tpu.memory_space<vmem>>, vector<1x32xf32>
      %40 = vector.broadcast %39 : vector<1x32xf32> to vector<16x32xf32>
      %41 = arith.addf %38, %40 : vector<16x32xf32>
      %c0_25 = arith.constant 0 : index
      %c0_26 = arith.constant 0 : index
      %42 = vector.load %arg8[%c0_25, %c0_26] : memref<16x32xf32, #tpu.memory_space<vmem>>, vector<16x32xf32>
      tpu.vector_store %arg8[%c0_25, %c0_26], %41 {strides = array<i32>} : memref<16x32xf32, #tpu.memory_space<vmem>>, vector<16x32xf32>,
    } else {
    }
    return
  }
  func.func @transform_0(%arg0: i32, %arg1: i32) -> (i32, i32) {
    %c0_i32 = arith.constant 0 : i32
    return %arg0, %arg1 : i32, i32
  }
  func.func @transform_1(%arg0: i32, %arg1: i32) -> (i32, i32) {
    %c0_i32 = arith.constant 0 : i32
    %c0_i32_0 = arith.constant 0 : i32
    return %arg1, %c0_i32 : i32, i32
  }
  func.func @transform_2(%arg0: i32, %arg1: i32) -> (i32, i32) {
    %c0_i32 = arith.constant 0 : i32
    %c0_i32_0 = arith.constant 0 : i32
    %c0_i32_1 = arith.constant 0 : i32
    return %c0_i32, %c0_i32_0 : i32, i32
  }
  func.func @transform_3(%arg0: i32, %arg1: i32) -> (i32, i32) {
    %c0_i32 = arith.constant 0 : i32
    %c0_i32_0 = arith.constant 0 : i32
    return %arg0, %c0_i32 : i32, i32
  }
  func.func @transform_4(%arg0: i32, %arg1: i32) -> (i32, i32) {
    %c0_i32 = arith.constant 0 : i32
    %c0_i32_0 = arith.constant 0 : i32
    %c0_i32_1 = arith.constant 0 : i32
    return %c0_i32, %c0_i32_0 : i32, i32
  }
  func.func @transform_5(%arg0: i32, %arg1: i32) -> (i32, i32) {
    %c0_i32 = arith.constant 0 : i32
    %c0_i32_0 = arith.constant 0 : i32
    %c0_i32_1 = arith.constant 0 : i32
    return %c0_i32, %c0_i32_0 : i32, i32
  }
  func.func @transform_6(%arg0: i32, %arg1: i32) -> (i32, i32) {
    %c0_i32 = arith.constant 0 : i32
    %c0_i32_0 = arith.constant 0 : i32
    return %arg0, %c0_i32 : i32, i32
  }
}

</mosaic_0001>

<llo_original>
// kernel: _self_attention_impl.5
$region0: #{_self_attention_impl.5}
  #allocation0 [shape = 'u32[]', space=smem, size = 0x4, offset = 0x4, fixed_abs, tag = 'smem constant byte address 0x4 - core index']
  #allocation1 [shape = 'u32[72,128]{1,0:T(1,128)}', space=vmem, size = 0x9000, scoped, tag = 'internal scratch']
  #allocation2 [shape = 'f32[16,32]{1,0:T(8,128)}', space=vmem, size = 0x2000, scoped, tag = 'scratch operand']
  %s0 = inlined_call_operand.vmem [shape: f32[16,32], index: 0, kind: input, shape index: {}]
  %s1 = inlined_call_operand.vmem [shape: f32[32,32], index: 1, kind: input, shape index: {}]
  %s2 = inlined_call_operand.vmem [shape: f32[1,32], index: 2, kind: input, shape index: {}]
  %s3 = inlined_call_operand.vmem [shape: f32[16,32], index: 3, kind: output, shape index: {}]
  %s4 = sld [smem:[#allocation0]]
  $region30: #{_self_attention_impl.5} parent=0
    _
  %s6 = ssub.s32 1, %s4
  %s7 = scalar_select 0, %s6, %s4
  // Predicated region
  $region2: #{_self_attention_impl.5} parent=0 // pred_check
    _
  $region3: #{_self_attention_impl.5} parent=0 // pred_check_branch
    %9 = sbr.rel (0) target = $region5
  $region4: #{_self_attention_impl.5} parent=0 // pred_region
    _
  $region5: #{_self_attention_impl.5} parent=0 // pred_fallthru
    _
  // Predicated region
  $region6: #{_self_attention_impl.5} parent=0 // pred_check
    _
  $region7: #{_self_attention_impl.5} parent=0 // pred_check_branch
    %11 = sbr.rel (0) target = $region9
  $region8: #{_self_attention_impl.5} parent=0 // pred_region
    _
  $region9: #{_self_attention_impl.5} parent=0 // pred_fallthru
    _
  // Predicated region
  $region10: #{_self_attention_impl.5} parent=0 // pred_check
    _
  $region11: #{_self_attention_impl.5} parent=0 // pred_check_branch
    %13 = sbr.rel (0) target = $region13
  $region12: #{_self_attention_impl.5} parent=0 // pred_region
    _
  $region13: #{_self_attention_impl.5} parent=0 // pred_fallthru
    _
  %p14 = scmp.eq.s32.totalorder 0, 0
  // Predicated region
  $region14: #{_self_attention_impl.5} parent=0 // pred_check
    %p15 = pneg %p14
  $region15: #{_self_attention_impl.5} parent=0 // pred_check_branch
    %17 = sbr.rel (%p15) target = $region17
  $region16: #{_self_attention_impl.5} parent=0 // pred_region
    %vm18 = vcmask 261120
    %19 = vst.msk [vmem:[#allocation2] sm:$0xff] %vm18, 0.0
    %20 = vst.msk [vmem:[#allocation2 + $0x8] sm:$0xff] %vm18, 0.0
  $region17: #{_self_attention_impl.5} parent=0 // pred_fallthru
    _
  %v21 = vld [vmem:[#allocation2] sm:$0xff]
  %v22 = vld [vmem:[#allocation2 + $0x8] sm:$0xff]
  %v23 = vld [vmem:[%s0] sm:$0xff]
  %v24 = vld [vmem:[%s0 + $0x8] sm:$0xff]
  %v25 = vld [vmem:[%s1] sm:$0xff]
  %v26 = vld [vmem:[%s1 + $0x8] sm:$0xff]
  %v27 = vld [vmem:[%s1 + $0x10] sm:$0xff]
  %v28 = vld [vmem:[%s1 + $0x18] sm:$0xff]
  %vm29 = vcmask 261120
  %v31 = vsel %vm29, %v23, 0
  %v34 = vsel %vm29, %v24, 0
  %36 = vmatpush.msra.mxu0 0.0
  %37 = vmatpush.msra.mxu0 0.0
  %38 = vmatpush.msra.mxu0 0.0
  %39 = vmatpush.msra.mxu0 0.0
  %40 = vmatpush.msra.mxu0 0.0
  %41 = vmatpush.msra.mxu0 0.0
  %42 = vmatpush.msra.mxu0 0.0
  %43 = vmatpush.msra.mxu0 0.0
  %44 = vmatpush.msra.mxu0 0.0
  %45 = vmatpush.msra.mxu0 0.0
  %46 = vmatpush.msra.mxu0 0.0
  %47 = vmatpush.msra.mxu0 0.0
  %48 = vmatpush.msra.mxu0 %v28
  %49 = vmatpush.msra.mxu0 %v27
  %50 = vmatpush.msra.mxu0 %v26
  %51 = vmatpush.msra.mxu0 %v25
  %52 = vmatmul.f32.gmra.mxu0 %v31
  %v53 = vpop.f32.mrf.mxu0
  %v54 = vadd.f32 0.0, %v53
  %55 = vmatmul.f32.gmra.mxu0 %v34
  %v56 = vpop.f32.mrf.mxu0
  %v57 = vadd.f32 0.0, %v56
  %58 = vdwg.mxu0
  %v59 = vadd.f32 %v21, %v54
  %v60 = vadd.f32 %v22, %v57
  %61 = vst.msk [vmem:[#allocation2] sm:$0xff] %vm29, %v59
  %62 = vst.msk [vmem:[#allocation2 + $0x8] sm:$0xff] %vm29, %v60
  // Predicated region
  $region18: #{_self_attention_impl.5} parent=0 // pred_check
    %p63 = pneg %p14
  $region19: #{_self_attention_impl.5} parent=0 // pred_check_branch
    %65 = sbr.rel (%p63) target = $region21
  $region20: #{_self_attention_impl.5} parent=0 // pred_region
    %v66 = vld [vmem:[#allocation2] sm:$0xff]
    %v67 = vld [vmem:[#allocation2 + $0x8] sm:$0xff]
    %v68 = vld [vmem:[%s2] sm:$0x1]
    %v70 = vperm.slane %v68, 0
    %v72 = vadd.f32 %v66, %v70
    %v73 = vadd.f32 %v67, %v70
    %74 = vst.msk [vmem:[%s3] sm:$0xff] %vm29, %v72
    %75 = vst.msk [vmem:[%s3 + $0x8] sm:$0xff] %vm29, %v73
  $region21: #{_self_attention_impl.5} parent=0 // pred_fallthru
    _
  // Predicated region
  $region22: #{_self_attention_impl.5} parent=0 // pred_check
    _
  $region23: #{_self_attention_impl.5} parent=0 // pred_check_branch
    %77 = sbr.rel (0) target = $region25
  $region24: #{_self_attention_impl.5} parent=0 // pred_region
    _
  $region25: #{_self_attention_impl.5} parent=0 // pred_fallthru
    _
  // Predicated region
  $region26: #{_self_attention_impl.5} parent=0 // pred_check
    _
  $region27: #{_self_attention_impl.5} parent=0 // pred_check_branch
    %79 = sbr.rel (0) target = $region29
  $region28: #{_self_attention_impl.5} parent=0 // pred_region
    _
  $region29: #{_self_attention_impl.5} parent=0 // pred_fallthru
    _

// kernel: _self_attention_impl.9
$region0: #{_self_attention_impl.9}
  #allocation0 [shape = 'u32[]', space=smem, size = 0x4, offset = 0x4, fixed_abs, tag = 'smem constant byte address 0x4 - core index']
  #allocation1 [shape = 'u32[72,128]{1,0:T(1,128)}', space=vmem, size = 0x9000, scoped, tag = 'internal scratch']
  #allocation2 [shape = 'f32[16,32]{1,0:T(8,128)}', space=vmem, size = 0x2000, scoped, tag = 'scratch operand']
  %s0 = inlined_call_operand.vmem [shape: f32[16,32], index: 0, kind: input, shape index: {}]
  %s1 = inlined_call_operand.vmem [shape: f32[32,32], index: 1, kind: input, shape index: {}]
  %s2 = inlined_call_operand.vmem [shape: f32[1,32], index: 2, kind: input, shape index: {}]
  %s3 = inlined_call_operand.vmem [shape: f32[16,32], index: 3, kind: input, shape index: {}]
  %s4 = inlined_call_operand.vmem [shape: f32[1,32], index: 4, kind: input, shape index: {}]
  %s5 = inlined_call_operand.vmem [shape: f32[1,32], index: 5, kind: input, shape index: {}]
  %s6 = inlined_call_operand.vmem [shape: f32[16,32], index: 6, kind: output, shape index: {}]
  %s7 = sld [smem:[#allocation0]]
  $region42: #{_self_attention_impl.9} parent=0
    _
  %s9 = ssub.s32 1, %s7
  %s10 = scalar_select 0, %s9, %s7
  // Predicated region
  $region2: #{_self_attention_impl.9} parent=0 // pred_check
    _
  $region3: #{_self_attention_impl.9} parent=0 // pred_check_branch
    %12 = sbr.rel (0) target = $region5
  $region4: #{_self_attention_impl.9} parent=0 // pred_region
    _
  $region5: #{_self_attention_impl.9} parent=0 // pred_fallthru
    _
  // Predicated region
  $region6: #{_self_attention_impl.9} parent=0 // pred_check
    _
  $region7: #{_self_attention_impl.9} parent=0 // pred_check_branch
    %14 = sbr.rel (0) target = $region9
  $region8: #{_self_attention_impl.9} parent=0 // pred_region
    _
  $region9: #{_self_attention_impl.9} parent=0 // pred_fallthru
    _
  // Predicated region
  $region10: #{_self_attention_impl.9} parent=0 // pred_check
    _
  $region11: #{_self_attention_impl.9} parent=0 // pred_check_branch
    %16 = sbr.rel (0) target = $region13
  $region12: #{_self_attention_impl.9} parent=0 // pred_region
    _
  $region13: #{_self_attention_impl.9} parent=0 // pred_fallthru
    _
  // Predicated region
  $region14: #{_self_attention_impl.9} parent=0 // pred_check
    _
  $region15: #{_self_attention_impl.9} parent=0 // pred_check_branch
    %18 = sbr.rel (0) target = $region17
  $region16: #{_self_attention_impl.9} parent=0 // pred_region
    _
  $region17: #{_self_attention_impl.9} parent=0 // pred_fallthru
    _
  // Predicated region
  $region18: #{_self_attention_impl.9} parent=0 // pred_check
    _
  $region19: #{_self_attention_impl.9} parent=0 // pred_check_branch
    %20 = sbr.rel (0) target = $region21
  $region20: #{_self_attention_impl.9} parent=0 // pred_region
    _
  $region21: #{_self_attention_impl.9} parent=0 // pred_fallthru
    _
  // Predicated region
  $region22: #{_self_attention_impl.9} parent=0 // pred_check
    _
  $region23: #{_self_attention_impl.9} parent=0 // pred_check_branch
    %22 = sbr.rel (0) target = $region25
  $region24: #{_self_attention_impl.9} parent=0 // pred_region
    _
  $region25: #{_self_attention_impl.9} parent=0 // pred_fallthru
    _
  %p23 = scmp.eq.s32.totalorder 0, 0
  // Predicated region
  $region26: #{_self_attention_impl.9} parent=0 // pred_check
    %p24 = pneg %p23
  $region27: #{_self_attention_impl.9} parent=0 // pred_check_branch
    %26 = sbr.rel (%p24) target = $region29
  $region28: #{_self_attention_impl.9} parent=0 // pred_region
    %vm27 = vcmask 261120
    %28 = vst.msk [vmem:[#allocation2] sm:$0xff] %vm27, 0.0
    %29 = vst.msk [vmem:[#allocation2 + $0x8] sm:$0xff] %vm27, 0.0
  $region29: #{_self_attention_impl.9} parent=0 // pred_fallthru
    _
  %v30 = vld [vmem:[#allocation2] sm:$0xff]
  %v31 = vld [vmem:[#allocation2 + $0x8] sm:$0xff]
  %v32 = vld [vmem:[%s0] sm:$0xff]
  %v33 = vld [vmem:[%s0 + $0x8] sm:$0xff]
  %v34 = vld [vmem:[%s1] sm:$0xff]
  %v35 = vld [vmem:[%s1 + $0x8] sm:$0xff]
  %v36 = vld [vmem:[%s1 + $0x10] sm:$0xff]
  %v37 = vld [vmem:[%s1 + $0x18] sm:$0xff]
  %vm38 = vcmask 261120
  %v40 = vsel %vm38, %v32, 0
  %v43 = vsel %vm38, %v33, 0
  %45 = vmatpush.msra.mxu0 0.0
  %46 = vmatpush.msra.mxu0 0.0
  %47 = vmatpush.msra.mxu0 0.0
  %48 = vmatpush.msra.mxu0 0.0
  %49 = vmatpush.msra.mxu0 0.0
  %50 = vmatpush.msra.mxu0 0.0
  %51 = vmatpush.msra.mxu0 0.0
  %52 = vmatpush.msra.mxu0 0.0
  %53 = vmatpush.msra.mxu0 0.0
  %54 = vmatpush.msra.mxu0 0.0
  %55 = vmatpush.msra.mxu0 0.0
  %56 = vmatpush.msra.mxu0 0.0
  %57 = vmatpush.msra.mxu0 %v37
  %58 = vmatpush.msra.mxu0 %v36
  %59 = vmatpush.msra.mxu0 %v35
  %60 = vmatpush.msra.mxu0 %v34
  %61 = vmatmul.f32.gmra.mxu0 %v40
  %v62 = vpop.f32.mrf.mxu0
  %v63 = vadd.f32 0.0, %v62
  %64 = vmatmul.f32.gmra.mxu0 %v43
  %v65 = vpop.f32.mrf.mxu0
  %v66 = vadd.f32 0.0, %v65
  %67 = vdwg.mxu0
  %v68 = vadd.f32 %v30, %v63
  %v69 = vadd.f32 %v31, %v66
  %70 = vst.msk [vmem:[#allocation2] sm:$0xff] %vm38, %v68
  %71 = vst.msk [vmem:[#allocation2 + $0x8] sm:$0xff] %vm38, %v69
  // Predicated region
  $region30: #{_self_attention_impl.9} parent=0 // pred_check
    %p72 = pneg %p23
  $region31: #{_self_attention_impl.9} parent=0 // pred_check_branch
    %74 = sbr.rel (%p72) target = $region33
  $region32: #{_self_attention_impl.9} parent=0 // pred_region
    %v75 = vld [vmem:[#allocation2] sm:$0xff]
    %v76 = vld [vmem:[#allocation2 + $0x8] sm:$0xff]
    %v77 = vld [vmem:[%s2] sm:$0x1]
    %v79 = vperm.slane %v77, 0
    %v81 = vadd.f32 %v75, %v79
    %v82 = vadd.f32 %v76, %v79
    %v83 = vld [vmem:[%s3] sm:$0xff]
    %v84 = vld [vmem:[%s3 + $0x8] sm:$0xff]
    %v85 = vadd.f32 %v81, %v83
    %v86 = vadd.f32 %v82, %v84
    %v87 = vsel %vm38, %v85, 0.0
    %88 = vadd.xlane.f32.xlu0 %v87
    %v89 = vpop.xlane.xlu0 %88
    %v90 = vsel %vm38, %v86, 0.0
    %91 = vadd.xlane.f32.xlu0 %v90
    %v92 = vpop.xlane.xlu0 %91
    %v93 = vrcp.pop 32.0
    %v94 = vmul.f32 32.0, %v93
    %v95 = vsub.f32 1.0, %v94
    %v96 = vmul.f32 %v93, %v95
    %v97 = vadd.f32 %v93, %v96
    %vm98 = vweird.f32 %v93
    %v99 = vsel %vm98, %v93, %v97
    %v100 = vmul.f32 %v89, %v99
    %v101 = vmul.f32 %v92, %v99
    %v102 = vsub.f32 %v85, %v100
    %v103 = vsub.f32 %v86, %v101
    %v104 = vmul.f32 %v102, %v102
    %v105 = vmul.f32 %v103, %v103
    %v106 = vsel %vm38, %v104, 0.0
    %107 = vadd.xlane.f32.xlu0 %v106
    %v108 = vpop.xlane.xlu0 %107
    %v109 = vsel %vm38, %v105, 0.0
    %110 = vadd.xlane.f32.xlu0 %v109
    %v111 = vpop.xlane.xlu0 %110
    %v112 = vmul.f32 %v108, %v99
    %v113 = vmul.f32 %v111, %v99
    %v114 = vadd.f32 %v112, 1e-05
    %v115 = vadd.f32 %v113, 1e-05
    %v116 = vrsqrt.pop %v114
    %v117 = vmul.f32 %v116, %v114
    %v118 = vmul.f32 %v117, %v116
    %v119 = vmul.f32 0.5, %v118
    %v120 = vsub.f32 1.5, %v119
    %v121 = vmul.f32 %v116, %v120
    %vm122 = vweird.f32 %v114
    %vm123 = vweird.f32 %v116
    %vm124 = vmor %vm122, %vm123
    %v125 = vsel %vm124, %v116, %v121
    %v126 = vrsqrt.pop %v115
    %v127 = vmul.f32 %v126, %v115
    %v128 = vmul.f32 %v127, %v126
    %v129 = vmul.f32 0.5, %v128
    %v130 = vsub.f32 1.5, %v129
    %v131 = vmul.f32 %v126, %v130
    %vm132 = vweird.f32 %v115
    %vm133 = vweird.f32 %v126
    %vm134 = vmor %vm132, %vm133
    %v135 = vsel %vm134, %v126, %v131
    %v136 = vmul.f32 %v102, %v125
    %v137 = vmul.f32 %v103, %v135
    %v138 = vld [vmem:[%s4] sm:$0x1]
    %v140 = vperm.slane %v138, 0
    %v142 = vmul.f32 %v136, %v140
    %v143 = vmul.f32 %v137, %v140
    %v144 = vld [vmem:[%s5] sm:$0x1]
    %v146 = vperm.slane %v144, 0
    %v148 = vadd.f32 %v142, %v146
    %v149 = vadd.f32 %v143, %v146
    %150 = vst.msk [vmem:[%s6] sm:$0xff] %vm38, %v148
    %151 = vst.msk [vmem:[%s6 + $0x8] sm:$0xff] %vm38, %v149
  $region33: #{_self_attention_impl.9} parent=0 // pred_fallthru
    _
  // Predicated region
  $region34: #{_self_attention_impl.9} parent=0 // pred_check
    _
  $region35: #{_self_attention_impl.9} parent=0 // pred_check_branch
    %153 = sbr.rel (0) target = $region37
  $region36: #{_self_attention_impl.9} parent=0 // pred_region
    _
  $region37: #{_self_attention_impl.9} parent=0 // pred_fallthru
    _
  // Predicated region
  $region38: #{_self_attention_impl.9} parent=0 // pred_check
    _
  $region39: #{_self_attention_impl.9} parent=0 // pred_check_branch
    %155 = sbr.rel (0) target = $region41
  $region40: #{_self_attention_impl.9} parent=0 // pred_region
    _
  $region41: #{_self_attention_impl.9} parent=0 // pred_fallthru
    _

// kernel: _self_attention_impl.8
$region0: #{_self_attention_impl.8}
  #allocation0 [shape = 'u32[]', space=smem, size = 0x4, offset = 0x4, fixed_abs, tag = 'smem constant byte address 0x4 - core index']
  #allocation1 [shape = 'u32[72,128]{1,0:T(1,128)}', space=vmem, size = 0x9000, scoped, tag = 'internal scratch']
  %s0 = inlined_call_operand.vmem [shape: f32[2,8,32], index: 0, kind: input, shape index: {}]
  %s1 = inlined_call_operand.vmem [shape: f32[2,8,32], index: 1, kind: input, shape index: {}]
  %s2 = inlined_call_operand.vmem [shape: f32[2,8,32], index: 2, kind: input, shape index: {}]
  %s3 = inlined_call_operand.vmem [shape: f32[2,8,32], index: 3, kind: output, shape index: {0}]
  %s4 = inlined_call_operand.hbm [shape: f32[2,8,8], index: 4, kind: output, shape index: {1}]
  %5 = xla_tuple %s3, %s4
  %s6 = sld [smem:[#allocation0]]
  $region53: #{_self_attention_impl.8} parent=0
    _
  %s8 = ssub.s32 1, %s6
  %s9 = scalar_select 0, %s8, %s6
  $region1: #{_self_attention_impl.8} parent=0
    #allocation2 [shape = 'u8[8192]{0}', space=vmem, size = 0x2000, scoped, tag = 'output window, operand 1']
    #allocation3 [shape = 's32[2]{0}', space=sflag, size = 0x8, scoped, tag = 'scoped memory for _self_attention_impl.8']
    %10 = vsyncpa [#allocation3], 0
    %s11 = scalar_lea.sflag [#allocation3], 1
    %12 = vsyncpa %s11, 0
    loop: start=0, step=1, limit=4
    $region2: #{_self_attention_impl.8} parent=1 // loop_pre_header
      _
    $region3: #{_self_attention_impl.8} parent=1 // loop_header
      %s14 = sphi 0, %s18
      %p15 = scmp.ge.s32.totalorder %s14, 4
      %s21 = sphi 0, %s33
      %s22 = sphi 0, %s29
      %s23 = sphi 0, %s21
      %s24 = sphi 0, %s22
      %s25 = sphi 0, %s23
      %s26 = sphi 0, %s24
      %s38 = sphi 0, %s40
      %s41 = sphi 0, %s38
      %s42 = sphi 0, %s41
      %s58 = sphi 0, %s42
      %s64 = sphi 0, %s66
      %s67 = sphi 0, %s64
      %s68 = sphi 0, %s67
      %s84 = sphi 0, %s68
      %s90 = sphi 0, %s92
      %s93 = sphi 0, %s90
      %s94 = sphi 0, %s93
      %s110 = sphi 0, %s94
      %s118 = sphi 0, %s120
      %s121 = sphi 0, %s118
      %s122 = sphi 0, %s121
      %s138 = sphi 0, %s122
      %s146 = sphi 0, %s148
      %s149 = sphi 0, %s146
      %s150 = sphi 0, %s149
      %s166 = sphi 0, %s150
    $region4: #{_self_attention_impl.8} parent=1 // loop_header_branch
      %17 = sbr.rel (%p15) target = $region8
    $region5: #{_self_attention_impl.8} parent=1 // loop_body
      %s19 = ssub.s32 %s14, 1
      %s20 = ssub.s32 %s14, 2
      %s27 = sadd.s32 1, %s22
      %p28 = scmp.ge.s32.totalorder %s27, 1
      %s29 = scalar_select %p28, 0, %s27
      %s30 = sadd.s32 1, %s21
      %s31 = scalar_select %p28, %s30, %s21
      %p32 = scmp.ge.s32.totalorder %s31, 2
      %s33 = scalar_select %p32, 0, %s31
      %s34 = ssub.s32 %s21, %s33
      %s35 = ssub.s32 %s22, %s29
      %s36 = sor.u32 %s34, %s35
      %p37 = scmp.eq.s32.totalorder %s36, 0
      %s39 = sadd.s32 %s38, 1
      %s40 = scalar_select %p37, %s38, %s39
      %p43 = pneg %p37
      %p44 = scmp.eq.s32.totalorder %s14, 1
      %p45 = por %p43, %p44
      %p46 = scmp.ne.s32.totalorder %s38, %s41
      %p47 = scmp.eq.s32.totalorder %s14, 0
      %p48 = por %p46, %p47
      %p49 = scmp.ne.s32.totalorder %s38, %s41
      %p50 = scmp.eq.s32.totalorder %s19, 1
      %p51 = por %p49, %p50
      %p52 = scmp.ne.s32.totalorder %s41, %s42
      %p53 = scmp.eq.s32.totalorder %s19, 0
      %p54 = por %p52, %p53
      %p55 = scmp.ne.s32.totalorder %s41, %s42
      %p56 = scmp.eq.s32.totalorder %s20, 1
      %p57 = por %p55, %p56
      %p59 = scmp.ne.s32.totalorder %s42, %s58
      %p60 = scmp.eq.s32.totalorder %s20, 0
      %p61 = por %p59, %p60
      %s62 = ssub.s32 %s21, %s33
      %p63 = scmp.eq.s32.totalorder %s62, 0
      %s65 = sadd.s32 %s64, 1
      %s66 = scalar_select %p63, %s64, %s65
      %p69 = pneg %p63
      %p70 = scmp.eq.s32.totalorder %s14, 1
      %p71 = por %p69, %p70
      %p72 = scmp.ne.s32.totalorder %s64, %s67
      %p73 = scmp.eq.s32.totalorder %s14, 0
      %p74 = por %p72, %p73
      %p75 = scmp.ne.s32.totalorder %s64, %s67
      %p76 = scmp.eq.s32.totalorder %s19, 1
      %p77 = por %p75, %p76
      %p78 = scmp.ne.s32.totalorder %s67, %s68
      %p79 = scmp.eq.s32.totalorder %s19, 0
      %p80 = por %p78, %p79
      %p81 = scmp.ne.s32.totalorder %s67, %s68
      %p82 = scmp.eq.s32.totalorder %s20, 1
      %p83 = por %p81, %p82
      %p85 = scmp.ne.s32.totalorder %s68, %s84
      %p86 = scmp.eq.s32.totalorder %s20, 0
      %p87 = por %p85, %p86
      %s88 = ssub.s32 %s21, %s33
      %p89 = scmp.eq.s32.totalorder %s88, 0
      %s91 = sadd.s32 %s90, 1
      %s92 = scalar_select %p89, %s90, %s91
      %p95 = pneg %p89
      %p96 = scmp.eq.s32.totalorder %s14, 1
      %p97 = por %p95, %p96
      %p98 = scmp.ne.s32.totalorder %s90, %s93
      %p99 = scmp.eq.s32.totalorder %s14, 0
      %p100 = por %p98, %p99
      %p101 = scmp.ne.s32.totalorder %s90, %s93
      %p102 = scmp.eq.s32.totalorder %s19, 1
      %p103 = por %p101, %p102
      %p104 = scmp.ne.s32.totalorder %s93, %s94
      %p105 = scmp.eq.s32.totalorder %s19, 0
      %p106 = por %p104, %p105
      %p107 = scmp.ne.s32.totalorder %s93, %s94
      %p108 = scmp.eq.s32.totalorder %s20, 1
      %p109 = por %p107, %p108
      %p111 = scmp.ne.s32.totalorder %s94, %s110
      %p112 = scmp.eq.s32.totalorder %s20, 0
      %p113 = por %p111, %p112
      %s114 = ssub.s32 %s21, %s33
      %s115 = ssub.s32 %s22, %s29
      %s116 = sor.u32 %s114, %s115
      %p117 = scmp.eq.s32.totalorder %s116, 0
      %s119 = sadd.s32 %s118, 1
      %s120 = scalar_select %p117, %s118, %s119
      %p123 = pneg %p117
      %p124 = scmp.eq.s32.totalorder %s14, 1
      %p125 = por %p123, %p124
      %p126 = scmp.ne.s32.totalorder %s118, %s121
      %p127 = scmp.eq.s32.totalorder %s14, 0
      %p128 = por %p126, %p127
      %p129 = scmp.ne.s32.totalorder %s118, %s121
      %p130 = scmp.eq.s32.totalorder %s19, 1
      %p131 = por %p129, %p130
      %p132 = scmp.ne.s32.totalorder %s121, %s122
      %p133 = scmp.eq.s32.totalorder %s19, 0
      %p134 = por %p132, %p133
      %p135 = scmp.ne.s32.totalorder %s121, %s122
      %p136 = scmp.eq.s32.totalorder %s20, 1
      %p137 = por %p135, %p136
      %p139 = scmp.ne.s32.totalorder %s122, %s138
      %p140 = scmp.eq.s32.totalorder %s20, 0
      %p141 = por %p139, %p140
      %s142 = ssub.s32 %s21, %s33
      %s143 = ssub.s32 %s22, %s29
      %s144 = sor.u32 %s142, %s143
      %p145 = scmp.eq.s32.totalorder %s144, 0
      %s147 = sadd.s32 %s146, 1
      %s148 = scalar_select %p145, %s146, %s147
      %p151 = pneg %p145
      %p152 = scmp.eq.s32.totalorder %s14, 1
      %p153 = por %p151, %p152
      %p154 = scmp.ne.s32.totalorder %s146, %s149
      %p155 = scmp.eq.s32.totalorder %s14, 0
      %p156 = por %p154, %p155
      %p157 = scmp.ne.s32.totalorder %s146, %s149
      %p158 = scmp.eq.s32.totalorder %s19, 1
      %p159 = por %p157, %p158
      %p160 = scmp.ne.s32.totalorder %s149, %s150
      %p161 = scmp.eq.s32.totalorder %s19, 0
      %p162 = por %p160, %p161
      %p163 = scmp.ne.s32.totalorder %s149, %s150
      %p164 = scmp.eq.s32.totalorder %s20, 1
      %p165 = por %p163, %p164
      %p167 = scmp.ne.s32.totalorder %s150, %s166
      %p168 = scmp.eq.s32.totalorder %s20, 0
      %p169 = por %p167, %p168
      %p170 = scmp.le.s32.totalorder 1, %s14
      %p171 = scmp.lt.s32.totalorder %s14, 3
      %p172 = pnand %p170, %p171
      %p173 = pneg %p172
      // Predicated region
      $region9: #{_self_attention_impl.8} parent=5 // pred_check
        _
      $region10: #{_self_attention_impl.8} parent=5 // pred_check_branch
        %175 = sbr.rel (%p172) target = $region12
      $region11: #{_self_attention_impl.8} parent=5 // pred_region
        %s176 = ssub.s32 %s14, 1
      $region12: #{_self_attention_impl.8} parent=5 // pred_fallthru
        _
      %p177 = scmp.lt.s32.totalorder %s14, 2
      // Predicated region
      $region13: #{_self_attention_impl.8} parent=5 // pred_check
        %p178 = pneg %p177
      $region14: #{_self_attention_impl.8} parent=5 // pred_check_branch
        %180 = sbr.rel (%p178) target = $region16
      $region15: #{_self_attention_impl.8} parent=5 // pred_region
        // Predicated region
        $region17: #{_self_attention_impl.8} parent=15 // pred_check
          %p181 = pneg %p48
        $region18: #{_self_attention_impl.8} parent=15 // pred_check_branch
          %183 = sbr.rel (%p181) target = $region20
        $region19: #{_self_attention_impl.8} parent=15 // pred_region
          %p184 = scmp.lt.s32.totalorder %s21, 1
          %s185 = scalar_select %p184, %s21, 1
          %p186 = scmp.lt.s32.totalorder %s22, 0
          %s187 = scalar_select %p186, %s22, 0
          %s188 = sadd.s32 %s187, %s185
          %s189 = smul.addr %s188, 8
          %s190 = scalar_lea.vmem %s0, %s189
        $region20: #{_self_attention_impl.8} parent=15 // pred_fallthru
          _
        // Predicated region
        $region21: #{_self_attention_impl.8} parent=15 // pred_check
          %p191 = pneg %p74
        $region22: #{_self_attention_impl.8} parent=15 // pred_check_branch
          %193 = sbr.rel (%p191) target = $region24
        $region23: #{_self_attention_impl.8} parent=15 // pred_region
          %p194 = scmp.lt.s32.totalorder %s21, 1
          %s195 = scalar_select %p194, %s21, 1
          %s196 = smul.addr %s195, 8
          %s197 = scalar_lea.vmem %s1, %s196
        $region24: #{_self_attention_impl.8} parent=15 // pred_fallthru
          _
        // Predicated region
        $region25: #{_self_attention_impl.8} parent=15 // pred_check
          %p198 = pneg %p100
        $region26: #{_self_attention_impl.8} parent=15 // pred_check_branch
          %200 = sbr.rel (%p198) target = $region28
        $region27: #{_self_attention_impl.8} parent=15 // pred_region
          %p201 = scmp.lt.s32.totalorder %s21, 1
          %s202 = scalar_select %p201, %s21, 1
          %s203 = smul.addr %s202, 8
          %s204 = scalar_lea.vmem %s2, %s203
        $region28: #{_self_attention_impl.8} parent=15 // pred_fallthru
          _
      $region16: #{_self_attention_impl.8} parent=5 // pred_fallthru
        _
      %p205 = scmp.le.s32.totalorder 1, %s14
      %p206 = scmp.lt.s32.totalorder %s14, 3
      %p207 = pnand %p205, %p206
      %p208 = pneg %p207
      // Predicated region
      $region29: #{_self_attention_impl.8} parent=5 // pred_check
        _
      $region30: #{_self_attention_impl.8} parent=5 // pred_check_branch
        %210 = sbr.rel (%p207) target = $region32
      $region31: #{_self_attention_impl.8} parent=5 // pred_region
        %s211 = ssub.s32 %s14, 1
        %p212 = scmp.lt.s32.totalorder %s23, 1
        %s213 = scalar_select %p212, %s23, 1
        %p214 = scmp.lt.s32.totalorder %s24, 0
        %s215 = scalar_select %p214, %s24, 0
        %s216 = sadd.s32 %s215, %s213
        %s217 = smul.addr %s216, 8
        %s218 = scalar_lea.vmem %s0, %s217
        %p219 = pneg %p54
        %p220 = pneg %p51
        %p221 = scmp.lt.s32.totalorder %s23, 1
        %s222 = scalar_select %p221, %s23, 1
        %s223 = smul.addr %s222, 8
        %s224 = scalar_lea.vmem %s1, %s223
        %p225 = pneg %p80
        %p226 = pneg %p77
        %p227 = scmp.lt.s32.totalorder %s23, 1
        %s228 = scalar_select %p227, %s23, 1
        %s229 = smul.addr %s228, 8
        %s230 = scalar_lea.vmem %s2, %s229
        %p231 = pneg %p106
        %p232 = pneg %p103
        %p233 = pneg %p134
        %p234 = pneg %p131
        %p235 = scmp.lt.s32.totalorder %s23, 1
        %s236 = scalar_select %p235, %s23, 1
        %p237 = scmp.lt.s32.totalorder %s24, 0
        %s238 = scalar_select %p237, %s24, 0
        %s239 = sadd.s32 %s238, %s236
        %s240 = smul.addr %s239, 8
        %s241 = scalar_lea.vmem %s3, %s240
        %p242 = pneg %p162
        %p243 = pneg %p159
        %s244 = sand.u32 %s149, 1
        %s245 = scalar_lea.sflag [#allocation3], %s244
        %s246 = sand.u32 %s149, 1
        %s247 = smul.addr %s246, 8
        %s248 = scalar_lea.vmem [#allocation2], %s247
        %p249 = scmp.lt.s32.totalorder %s23, 1
        %s250 = scalar_select %p249, %s23, 1
        %p251 = scmp.lt.s32.totalorder %s24, 0
        %s252 = scalar_select %p251, %s24, 0
        %s253 = sadd.s32 %s252, %s250
        %s254 = smul.addr %s253, 8
        %s255 = scalar_lea.vmem %s0, %s254
        %p256 = scmp.lt.s32.totalorder %s23, 1
        %s257 = scalar_select %p256, %s23, 1
        %s258 = smul.addr %s257, 8
        %s259 = scalar_lea.vmem %s1, %s258
        %p260 = scmp.lt.s32.totalorder %s23, 1
        %s261 = scalar_select %p260, %s23, 1
        %s262 = smul.addr %s261, 8
        %s263 = scalar_lea.vmem %s2, %s262
        %p264 = scmp.lt.s32.totalorder %s23, 1
        %s265 = scalar_select %p264, %s23, 1
        %p266 = scmp.lt.s32.totalorder %s24, 0
        %s267 = scalar_select %p266, %s24, 0
        %s268 = sadd.s32 %s267, %s265
        %s269 = smul.addr %s268, 8
        %s270 = scalar_lea.vmem %s3, %s269
        %v271 = vld [vmem:[%s255] sm:$0xff]
        %v272 = vmul.f32 %v271, 0.35355338
        %v273 = vld [vmem:[%s259] sm:$0xff]
        %v274 = vld [vmem:[%s263] sm:$0xff]
        %276 = vrot.lane.b32.xlu0 %v272, 120
        %v277 = vpop.permute.xlu0 %276
        %278 = vrot.lane.b32.xlu0 %v272, 112
        %v279 = vpop.permute.xlu0 %278
        %280 = vrot.lane.b32.xlu0 %v272, 104
        %v281 = vpop.permute.xlu0 %280
        %283 = vrot.lane.b32.xlu0 %v273, 120
        %v284 = vpop.permute.xlu0 %283
        %286 = vrot.lane.b32.xlu0 %v273, 112
        %v287 = vpop.permute.xlu0 %286
        %289 = vrot.lane.b32.xlu0 %v273, 104
        %v290 = vpop.permute.xlu0 %289
        %v292 = vrot.slane %v287, 4
        %vm293 = vcmask 1047556
        %v294 = vsel %vm293, %v292, %v273
        %v295 = vrot.slane %v273, 4
        %v296 = vsel %vm293, %v287, %v295
        %v298 = vunpack.c.l.s4 1983009808
        %v299 = vunpack.c.0.s8 %v298
        %v300 = vperm.slane %v294, %v299
        %v302 = vunpack.c.l.s4 1983009808
        %v303 = vunpack.c.0.s8 %v302
        %v304 = vperm.slane %v296, %v303
        %v305 = vrot.slane %v290, 4
        %v306 = vsel %vm293, %v305, %v284
        %v307 = vrot.slane %v284, 4
        %v308 = vsel %vm293, %v290, %v307
        %v310 = vunpack.c.l.s4 1983009808
        %v311 = vunpack.c.0.s8 %v310
        %v312 = vperm.slane %v306, %v311
        %v314 = vunpack.c.l.s4 1983009808
        %v315 = vunpack.c.0.s8 %v314
        %v316 = vperm.slane %v308, %v315
        %v317 = vrot.slane %v312, 4
        %v318 = vsel %vm293, %v317, %v300
        %v319 = vrot.slane %v300, 4
        %v320 = vsel %vm293, %v312, %v319
        %v322 = vunpack.c.l.s4 1934713408
        %v323 = vunpack.c.0.s8 %v322
        %v324 = vperm.slane %v318, %v323
        %v326 = vunpack.c.l.s4 1934713408
        %v327 = vunpack.c.0.s8 %v326
        %v328 = vperm.slane %v320, %v327
        %v329 = vrot.slane %v316, 4
        %v330 = vsel %vm293, %v329, %v304
        %v331 = vrot.slane %v304, 4
        %v332 = vsel %vm293, %v316, %v331
        %v334 = vunpack.c.l.s4 1934713408
        %v335 = vunpack.c.0.s8 %v334
        %v336 = vperm.slane %v330, %v335
        %v338 = vunpack.c.l.s4 1934713408
        %v339 = vunpack.c.0.s8 %v338
        %v340 = vperm.slane %v332, %v339
        %v341 = vrot.slane %v324, 4
        %v342 = vsel %vm293, 0.0, %v341
        %v343 = vrot.slane %v328, 4
        %v344 = vsel %vm293, 0.0, %v343
        %v345 = vrot.slane %v336, 4
        %v346 = vsel %vm293, 0.0, %v345
        %v347 = vrot.slane %v340, 4
        %v348 = vsel %vm293, 0.0, %v347
        %350 = vrot.lane.b32.xlu0 %v274, 120
        %v351 = vpop.permute.xlu0 %350
        %353 = vrot.lane.b32.xlu0 %v274, 112
        %v354 = vpop.permute.xlu0 %353
        %356 = vrot.lane.b32.xlu0 %v274, 104
        %v357 = vpop.permute.xlu0 %356
        %v359 = vrot.slane %v354, 4
        %v360 = vsel %vm293, %v359, %v274
        %v361 = vrot.slane %v274, 4
        %v362 = vsel %vm293, %v354, %v361
        %v364 = vunpack.c.l.s4 1983009808
        %v365 = vunpack.c.0.s8 %v364
        %v366 = vperm.slane %v360, %v365
        %v368 = vunpack.c.l.s4 1983009808
        %v369 = vunpack.c.0.s8 %v368
        %v370 = vperm.slane %v362, %v369
        %v371 = vrot.slane %v357, 4
        %v372 = vsel %vm293, %v371, %v351
        %v373 = vrot.slane %v351, 4
        %v374 = vsel %vm293, %v357, %v373
        %v376 = vunpack.c.l.s4 1983009808
        %v377 = vunpack.c.0.s8 %v376
        %v378 = vperm.slane %v372, %v377
        %v380 = vunpack.c.l.s4 1983009808
        %v381 = vunpack.c.0.s8 %v380
        %v382 = vperm.slane %v374, %v381
        %v383 = vrot.slane %v378, 4
        %v384 = vsel %vm293, %v383, %v366
        %v385 = vrot.slane %v366, 4
        %v386 = vsel %vm293, %v378, %v385
        %v388 = vunpack.c.l.s4 1934713408
        %v389 = vunpack.c.0.s8 %v388
        %v390 = vperm.slane %v384, %v389
        %v392 = vunpack.c.l.s4 1934713408
        %v393 = vunpack.c.0.s8 %v392
        %v394 = vperm.slane %v386, %v393
        %v395 = vrot.slane %v382, 4
        %v396 = vsel %vm293, %v395, %v370
        %v397 = vrot.slane %v370, 4
        %v398 = vsel %vm293, %v382, %v397
        %v400 = vunpack.c.l.s4 1934713408
        %v401 = vunpack.c.0.s8 %v400
        %v402 = vperm.slane %v396, %v401
        %v404 = vunpack.c.l.s4 1934713408
        %v405 = vunpack.c.0.s8 %v404
        %v406 = vperm.slane %v398, %v405
        %v407 = vrot.slane %v390, 4
        %v408 = vsel %vm293, 0.0, %v407
        %v409 = vrot.slane %v394, 4
        %v410 = vsel %vm293, 0.0, %v409
        %v411 = vrot.slane %v402, 4
        %v412 = vsel %vm293, 0.0, %v411
        %v413 = vrot.slane %v406, 4
        %v414 = vsel %vm293, 0.0, %v413
        %415 = vxpose.xlu0.b32.start [1/16] %v324, 128
        %416 = vxpose.xlu0.b32.cont [2/16] 0.0, 128
        %417 = vxpose.xlu0.b32.cont [3/16] 0.0, 128
        %418 = vxpose.xlu0.b32.cont [4/16] 0.0, 128
        %419 = vxpose.xlu0.b32.cont [5/16] 0.0, 128
        %420 = vxpose.xlu0.b32.cont [6/16] 0.0, 128
        %421 = vxpose.xlu0.b32.cont [7/16] 0.0, 128
        %422 = vxpose.xlu0.b32.cont [8/16] 0.0, 128
        %423 = vxpose.xlu0.b32.cont [9/16] 0.0, 128
        %424 = vxpose.xlu0.b32.cont [10/16] 0.0, 128
        %425 = vxpose.xlu0.b32.cont [11/16] 0.0, 128
        %426 = vxpose.xlu0.b32.cont [12/16] 0.0, 128
        %427 = vxpose.xlu0.b32.cont [13/16] 0.0, 128
        %428 = vxpose.xlu0.b32.cont [14/16] 0.0, 128
        %429 = vxpose.xlu0.b32.cont [15/16] 0.0, 128
        %430 = vxpose.xlu0.b32.end [16/16] 0.0, 128
        %v431 = vpop.trf.xlu0
        %v432 = vpop.trf.xlu0
        %v433 = vpop.trf.xlu0
        %v434 = vpop.trf.xlu0
        %v435 = vpop.trf.xlu0
        %v436 = vpop.trf.xlu0
        %v437 = vpop.trf.xlu0
        %v438 = vpop.trf.xlu0
        %v439 = vpop.trf.xlu0
        %v440 = vpop.trf.xlu0
        %v441 = vpop.trf.xlu0
        %v442 = vpop.trf.xlu0
        %v443 = vpop.trf.xlu0
        %v444 = vpop.trf.xlu0
        %v445 = vpop.trf.xlu0
        %v446 = vpop.trf.xlu0
        %447 = vxpose.xlu0.b32.start [1/16] %v342, 128
        %448 = vxpose.xlu0.b32.cont [2/16] 0.0, 128
        %449 = vxpose.xlu0.b32.cont [3/16] 0.0, 128
        %450 = vxpose.xlu0.b32.cont [4/16] 0.0, 128
        %451 = vxpose.xlu0.b32.cont [5/16] 0.0, 128
        %452 = vxpose.xlu0.b32.cont [6/16] 0.0, 128
        %453 = vxpose.xlu0.b32.cont [7/16] 0.0, 128
        %454 = vxpose.xlu0.b32.cont [8/16] 0.0, 128
        %455 = vxpose.xlu0.b32.cont [9/16] 0.0, 128
        %456 = vxpose.xlu0.b32.cont [10/16] 0.0, 128
        %457 = vxpose.xlu0.b32.cont [11/16] 0.0, 128
        %458 = vxpose.xlu0.b32.cont [12/16] 0.0, 128
        %459 = vxpose.xlu0.b32.cont [13/16] 0.0, 128
        %460 = vxpose.xlu0.b32.cont [14/16] 0.0, 128
        %461 = vxpose.xlu0.b32.cont [15/16] 0.0, 128
        %462 = vxpose.xlu0.b32.end [16/16] 0.0, 128
        %v463 = vpop.trf.xlu0
        %v464 = vpop.trf.xlu0
        %v465 = vpop.trf.xlu0
        %v466 = vpop.trf.xlu0
        %v467 = vpop.trf.xlu0
        %v468 = vpop.trf.xlu0
        %v469 = vpop.trf.xlu0
        %v470 = vpop.trf.xlu0
        %v471 = vpop.trf.xlu0
        %v472 = vpop.trf.xlu0
        %v473 = vpop.trf.xlu0
        %v474 = vpop.trf.xlu0
        %v475 = vpop.trf.xlu0
        %v476 = vpop.trf.xlu0
        %v477 = vpop.trf.xlu0
        %v478 = vpop.trf.xlu0
        %479 = vxpose.xlu0.b32.start [1/16] %v328, 128
        %480 = vxpose.xlu0.b32.cont [2/16] 0.0, 128
        %481 = vxpose.xlu0.b32.cont [3/16] 0.0, 128
        %482 = vxpose.xlu0.b32.cont [4/16] 0.0, 128
        %483 = vxpose.xlu0.b32.cont [5/16] 0.0, 128
        %484 = vxpose.xlu0.b32.cont [6/16] 0.0, 128
        %485 = vxpose.xlu0.b32.cont [7/16] 0.0, 128
        %486 = vxpose.xlu0.b32.cont [8/16] 0.0, 128
        %487 = vxpose.xlu0.b32.cont [9/16] 0.0, 128
        %488 = vxpose.xlu0.b32.cont [10/16] 0.0, 128
        %489 = vxpose.xlu0.b32.cont [11/16] 0.0, 128
        %490 = vxpose.xlu0.b32.cont [12/16] 0.0, 128
        %491 = vxpose.xlu0.b32.cont [13/16] 0.0, 128
        %492 = vxpose.xlu0.b32.cont [14/16] 0.0, 128
        %493 = vxpose.xlu0.b32.cont [15/16] 0.0, 128
        %494 = vxpose.xlu0.b32.end [16/16] 0.0, 128
        %v495 = vpop.trf.xlu0
        %v496 = vpop.trf.xlu0
        %v497 = vpop.trf.xlu0
        %v498 = vpop.trf.xlu0
        %v499 = vpop.trf.xlu0
        %v500 = vpop.trf.xlu0
        %v501 = vpop.trf.xlu0
        %v502 = vpop.trf.xlu0
        %v503 = vpop.trf.xlu0
        %v504 = vpop.trf.xlu0
        %v505 = vpop.trf.xlu0
        %v506 = vpop.trf.xlu0
        %v507 = vpop.trf.xlu0
        %v508 = vpop.trf.xlu0
        %v509 = vpop.trf.xlu0
        %v510 = vpop.trf.xlu0
        %511 = vxpose.xlu0.b32.start [1/16] %v344, 128
        %512 = vxpose.xlu0.b32.cont [2/16] 0.0, 128
        %513 = vxpose.xlu0.b32.cont [3/16] 0.0, 128
        %514 = vxpose.xlu0.b32.cont [4/16] 0.0, 128
        %515 = vxpose.xlu0.b32.cont [5/16] 0.0, 128
        %516 = vxpose.xlu0.b32.cont [6/16] 0.0, 128
        %517 = vxpose.xlu0.b32.cont [7/16] 0.0, 128
        %518 = vxpose.xlu0.b32.cont [8/16] 0.0, 128
        %519 = vxpose.xlu0.b32.cont [9/16] 0.0, 128
        %520 = vxpose.xlu0.b32.cont [10/16] 0.0, 128
        %521 = vxpose.xlu0.b32.cont [11/16] 0.0, 128
        %522 = vxpose.xlu0.b32.cont [12/16] 0.0, 128
        %523 = vxpose.xlu0.b32.cont [13/16] 0.0, 128
        %524 = vxpose.xlu0.b32.cont [14/16] 0.0, 128
        %525 = vxpose.xlu0.b32.cont [15/16] 0.0, 128
        %526 = vxpose.xlu0.b32.end [16/16] 0.0, 128
        %v527 = vpop.trf.xlu0
        %v528 = vpop.trf.xlu0
        %v529 = vpop.trf.xlu0
        %v530 = vpop.trf.xlu0
        %v531 = vpop.trf.xlu0
        %v532 = vpop.trf.xlu0
        %v533 = vpop.trf.xlu0
        %v534 = vpop.trf.xlu0
        %v535 = vpop.trf.xlu0
        %v536 = vpop.trf.xlu0
        %v537 = vpop.trf.xlu0
        %v538 = vpop.trf.xlu0
        %v539 = vpop.trf.xlu0
        %v540 = vpop.trf.xlu0
        %v541 = vpop.trf.xlu0
        %v542 = vpop.trf.xlu0
        %543 = vxpose.xlu0.b32.start [1/16] %v336, 128
        %544 = vxpose.xlu0.b32.cont [2/16] 0.0, 128
        %545 = vxpose.xlu0.b32.cont [3/16] 0.0, 128
        %546 = vxpose.xlu0.b32.cont [4/16] 0.0, 128
        %547 = vxpose.xlu0.b32.cont [5/16] 0.0, 128
        %548 = vxpose.xlu0.b32.cont [6/16] 0.0, 128
        %549 = vxpose.xlu0.b32.cont [7/16] 0.0, 128
        %550 = vxpose.xlu0.b32.cont [8/16] 0.0, 128
        %551 = vxpose.xlu0.b32.cont [9/16] 0.0, 128
        %552 = vxpose.xlu0.b32.cont [10/16] 0.0, 128
        %553 = vxpose.xlu0.b32.cont [11/16] 0.0, 128
        %554 = vxpose.xlu0.b32.cont [12/16] 0.0, 128
        %555 = vxpose.xlu0.b32.cont [13/16] 0.0, 128
        %556 = vxpose.xlu0.b32.cont [14/16] 0.0, 128
        %557 = vxpose.xlu0.b32.cont [15/16] 0.0, 128
        %558 = vxpose.xlu0.b32.end [16/16] 0.0, 128
        %v559 = vpop.trf.xlu0
        %v560 = vpop.trf.xlu0
        %v561 = vpop.trf.xlu0
        %v562 = vpop.trf.xlu0
        %v563 = vpop.trf.xlu0
        %v564 = vpop.trf.xlu0
        %v565 = vpop.trf.xlu0
        %v566 = vpop.trf.xlu0
        %v567 = vpop.trf.xlu0
        %v568 = vpop.trf.xlu0
        %v569 = vpop.trf.xlu0
        %v570 = vpop.trf.xlu0
        %v571 = vpop.trf.xlu0
        %v572 = vpop.trf.xlu0
        %v573 = vpop.trf.xlu0
        %v574 = vpop.trf.xlu0
        %575 = vxpose.xlu0.b32.start [1/16] %v346, 128
        %576 = vxpose.xlu0.b32.cont [2/16] 0.0, 128
        %577 = vxpose.xlu0.b32.cont [3/16] 0.0, 128
        %578 = vxpose.xlu0.b32.cont [4/16] 0.0, 128
        %579 = vxpose.xlu0.b32.cont [5/16] 0.0, 128
        %580 = vxpose.xlu0.b32.cont [6/16] 0.0, 128
        %581 = vxpose.xlu0.b32.cont [7/16] 0.0, 128
        %582 = vxpose.xlu0.b32.cont [8/16] 0.0, 128
        %583 = vxpose.xlu0.b32.cont [9/16] 0.0, 128
        %584 = vxpose.xlu0.b32.cont [10/16] 0.0, 128
        %585 = vxpose.xlu0.b32.cont [11/16] 0.0, 128
        %586 = vxpose.xlu0.b32.cont [12/16] 0.0, 128
        %587 = vxpose.xlu0.b32.cont [13/16] 0.0, 128
        %588 = vxpose.xlu0.b32.cont [14/16] 0.0, 128
        %589 = vxpose.xlu0.b32.cont [15/16] 0.0, 128
        %590 = vxpose.xlu0.b32.end [16/16] 0.0, 128
        %v591 = vpop.trf.xlu0
        %v592 = vpop.trf.xlu0
        %v593 = vpop.trf.xlu0
        %v594 = vpop.trf.xlu0
        %v595 = vpop.trf.xlu0
        %v596 = vpop.trf.xlu0
        %v597 = vpop.trf.xlu0
        %v598 = vpop.trf.xlu0
        %v599 = vpop.trf.xlu0
        %v600 = vpop.trf.xlu0
        %v601 = vpop.trf.xlu0
        %v602 = vpop.trf.xlu0
        %v603 = vpop.trf.xlu0
        %v604 = vpop.trf.xlu0
        %v605 = vpop.trf.xlu0
        %v606 = vpop.trf.xlu0
        %607 = vxpose.xlu0.b32.start [1/16] %v340, 128
        %608 = vxpose.xlu0.b32.cont [2/16] 0.0, 128
        %609 = vxpose.xlu0.b32.cont [3/16] 0.0, 128
        %610 = vxpose.xlu0.b32.cont [4/16] 0.0, 128
        %611 = vxpose.xlu0.b32.cont [5/16] 0.0, 128
        %612 = vxpose.xlu0.b32.cont [6/16] 0.0, 128
        %613 = vxpose.xlu0.b32.cont [7/16] 0.0, 128
        %614 = vxpose.xlu0.b32.cont [8/16] 0.0, 128
        %615 = vxpose.xlu0.b32.cont [9/16] 0.0, 128
        %616 = vxpose.xlu0.b32.cont [10/16] 0.0, 128
        %617 = vxpose.xlu0.b32.cont [11/16] 0.0, 128
        %618 = vxpose.xlu0.b32.cont [12/16] 0.0, 128
        %619 = vxpose.xlu0.b32.cont [13/16] 0.0, 128
        %620 = vxpose.xlu0.b32.cont [14/16] 0.0, 128
        %621 = vxpose.xlu0.b32.cont [15/16] 0.0, 128
        %622 = vxpose.xlu0.b32.end [16/16] 0.0, 128
        %v623 = vpop.trf.xlu0
        %v624 = vpop.trf.xlu0
        %v625 = vpop.trf.xlu0
        %v626 = vpop.trf.xlu0
        %v627 = vpop.trf.xlu0
        %v628 = vpop.trf.xlu0
        %v629 = vpop.trf.xlu0
        %v630 = vpop.trf.xlu0
        %v631 = vpop.trf.xlu0
        %v632 = vpop.trf.xlu0
        %v633 = vpop.trf.xlu0
        %v634 = vpop.trf.xlu0
        %v635 = vpop.trf.xlu0
        %v636 = vpop.trf.xlu0
        %v637 = vpop.trf.xlu0
        %v638 = vpop.trf.xlu0
        %639 = vxpose.xlu0.b32.start [1/16] %v348, 128
        %640 = vxpose.xlu0.b32.cont [2/16] 0.0, 128
        %641 = vxpose.xlu0.b32.cont [3/16] 0.0, 128
        %642 = vxpose.xlu0.b32.cont [4/16] 0.0, 128
        %643 = vxpose.xlu0.b32.cont [5/16] 0.0, 128
        %644 = vxpose.xlu0.b32.cont [6/16] 0.0, 128
        %645 = vxpose.xlu0.b32.cont [7/16] 0.0, 128
        %646 = vxpose.xlu0.b32.cont [8/16] 0.0, 128
        %647 = vxpose.xlu0.b32.cont [9/16] 0.0, 128
        %648 = vxpose.xlu0.b32.cont [10/16] 0.0, 128
        %649 = vxpose.xlu0.b32.cont [11/16] 0.0, 128
        %650 = vxpose.xlu0.b32.cont [12/16] 0.0, 128
        %651 = vxpose.xlu0.b32.cont [13/16] 0.0, 128
        %652 = vxpose.xlu0.b32.cont [14/16] 0.0, 128
        %653 = vxpose.xlu0.b32.cont [15/16] 0.0, 128
        %654 = vxpose.xlu0.b32.end [16/16] 0.0, 128
        %v655 = vpop.trf.xlu0
        %v656 = vpop.trf.xlu0
        %v657 = vpop.trf.xlu0
        %v658 = vpop.trf.xlu0
        %v659 = vpop.trf.xlu0
        %v660 = vpop.trf.xlu0
        %v661 = vpop.trf.xlu0
        %v662 = vpop.trf.xlu0
        %v663 = vpop.trf.xlu0
        %v664 = vpop.trf.xlu0
        %v665 = vpop.trf.xlu0
        %v666 = vpop.trf.xlu0
        %v667 = vpop.trf.xlu0
        %v668 = vpop.trf.xlu0
        %v669 = vpop.trf.xlu0
        %v670 = vpop.trf.xlu0
        %v671 = vrot.slane %v495, 4
        %v672 = vsel %vm293, %v671, %v431
        %v673 = vrot.slane %v431, 4
        %v674 = vsel %vm293, %v495, %v673
        %v676 = vunpack.c.l.s4 1983009808
        %v677 = vunpack.c.0.s8 %v676
        %v678 = vperm.slane %v672, %v677
        %v680 = vunpack.c.l.s4 1983009808
        %v681 = vunpack.c.0.s8 %v680
        %v682 = vperm.slane %v674, %v681
        %v683 = vrot.slane %v527, 4
        %v684 = vsel %vm293, %v683, %v463
        %v685 = vrot.slane %v463, 4
        %v686 = vsel %vm293, %v527, %v685
        %v688 = vunpack.c.l.s4 1983009808
        %v689 = vunpack.c.0.s8 %v688
        %v690 = vperm.slane %v684, %v689
        %v692 = vunpack.c.l.s4 1983009808
        %v693 = vunpack.c.0.s8 %v692
        %v694 = vperm.slane %v686, %v693
        %v695 = vrot.slane %v623, 4
        %v696 = vsel %vm293, %v695, %v559
        %v697 = vrot.slane %v559, 4
        %v698 = vsel %vm293, %v623, %v697
        %v700 = vunpack.c.l.s4 1983009808
        %v701 = vunpack.c.0.s8 %v700
        %v702 = vperm.slane %v696, %v701
        %v704 = vunpack.c.l.s4 1983009808
        %v705 = vunpack.c.0.s8 %v704
        %v706 = vperm.slane %v698, %v705
        %v707 = vrot.slane %v655, 4
        %v708 = vsel %vm293, %v707, %v591
        %v709 = vrot.slane %v591, 4
        %v710 = vsel %vm293, %v655, %v709
        %v712 = vunpack.c.l.s4 1983009808
        %v713 = vunpack.c.0.s8 %v712
        %v714 = vperm.slane %v708, %v713
        %v716 = vunpack.c.l.s4 1983009808
        %v717 = vunpack.c.0.s8 %v716
        %v718 = vperm.slane %v710, %v717
        %v719 = vrot.slane %v690, 4
        %v720 = vsel %vm293, %v719, %v678
        %v721 = vrot.slane %v678, 4
        %v722 = vsel %vm293, %v690, %v721
        %v724 = vunpack.c.l.s4 1934713408
        %v725 = vunpack.c.0.s8 %v724
        %v726 = vperm.slane %v720, %v725
        %v728 = vunpack.c.l.s4 1934713408
        %v729 = vunpack.c.0.s8 %v728
        %v730 = vperm.slane %v722, %v729
        %v731 = vrot.slane %v694, 4
        %v732 = vsel %vm293, %v731, %v682
        %v733 = vrot.slane %v682, 4
        %v734 = vsel %vm293, %v694, %v733
        %v736 = vunpack.c.l.s4 1934713408
        %v737 = vunpack.c.0.s8 %v736
        %v738 = vperm.slane %v732, %v737
        %v740 = vunpack.c.l.s4 1934713408
        %v741 = vunpack.c.0.s8 %v740
        %v742 = vperm.slane %v734, %v741
        %v743 = vrot.slane %v714, 4
        %v744 = vsel %vm293, %v743, %v702
        %v745 = vrot.slane %v702, 4
        %v746 = vsel %vm293, %v714, %v745
        %v748 = vunpack.c.l.s4 1934713408
        %v749 = vunpack.c.0.s8 %v748
        %v750 = vperm.slane %v744, %v749
        %v752 = vunpack.c.l.s4 1934713408
        %v753 = vunpack.c.0.s8 %v752
        %v754 = vperm.slane %v746, %v753
        %v755 = vrot.slane %v718, 4
        %v756 = vsel %vm293, %v755, %v706
        %v757 = vrot.slane %v706, 4
        %v758 = vsel %vm293, %v718, %v757
        %v760 = vunpack.c.l.s4 1934713408
        %v761 = vunpack.c.0.s8 %v760
        %v762 = vperm.slane %v756, %v761
        %v764 = vunpack.c.l.s4 1934713408
        %v765 = vunpack.c.0.s8 %v764
        %v766 = vperm.slane %v758, %v765
        %v767 = vrot.slane %v750, 4
        %v768 = vsel %vm293, %v767, %v726
        %v769 = vrot.slane %v726, 4
        %v770 = vsel %vm293, %v750, %v769
        %v771 = vrot.slane %v754, 4
        %v772 = vsel %vm293, %v771, %v730
        %v773 = vrot.slane %v730, 4
        %v774 = vsel %vm293, %v754, %v773
        %v775 = vrot.slane %v762, 4
        %v776 = vsel %vm293, %v775, %v738
        %v777 = vrot.slane %v738, 4
        %v778 = vsel %vm293, %v762, %v777
        %v779 = vrot.slane %v766, 4
        %v780 = vsel %vm293, %v779, %v742
        %v781 = vrot.slane %v742, 4
        %v782 = vsel %vm293, %v766, %v781
        %783 = vxpose.xlu0.b32.start [1/16] %v768, 128
        %784 = vxpose.xlu0.b32.cont [2/16] 0.0, 128
        %785 = vxpose.xlu0.b32.cont [3/16] 0.0, 128
        %786 = vxpose.xlu0.b32.cont [4/16] 0.0, 128
        %787 = vxpose.xlu0.b32.cont [5/16] 0.0, 128
        %788 = vxpose.xlu0.b32.cont [6/16] 0.0, 128
        %789 = vxpose.xlu0.b32.cont [7/16] 0.0, 128
        %790 = vxpose.xlu0.b32.cont [8/16] 0.0, 128
        %791 = vxpose.xlu0.b32.cont [9/16] 0.0, 128
        %792 = vxpose.xlu0.b32.cont [10/16] 0.0, 128
        %793 = vxpose.xlu0.b32.cont [11/16] 0.0, 128
        %794 = vxpose.xlu0.b32.cont [12/16] 0.0, 128
        %795 = vxpose.xlu0.b32.cont [13/16] 0.0, 128
        %796 = vxpose.xlu0.b32.cont [14/16] 0.0, 128
        %797 = vxpose.xlu0.b32.cont [15/16] 0.0, 128
        %798 = vxpose.xlu0.b32.end [16/16] 0.0, 128
        %v799 = vpop.trf.xlu0
        %v800 = vpop.trf.xlu0
        %v801 = vpop.trf.xlu0
        %v802 = vpop.trf.xlu0
        %v803 = vpop.trf.xlu0
        %v804 = vpop.trf.xlu0
        %v805 = vpop.trf.xlu0
        %v806 = vpop.trf.xlu0
        %v807 = vpop.trf.xlu0
        %v808 = vpop.trf.xlu0
        %v809 = vpop.trf.xlu0
        %v810 = vpop.trf.xlu0
        %v811 = vpop.trf.xlu0
        %v812 = vpop.trf.xlu0
        %v813 = vpop.trf.xlu0
        %v814 = vpop.trf.xlu0
        %815 = vxpose.xlu0.b32.start [1/16] %v770, 128
        %816 = vxpose.xlu0.b32.cont [2/16] 0.0, 128
        %817 = vxpose.xlu0.b32.cont [3/16] 0.0, 128
        %818 = vxpose.xlu0.b32.cont [4/16] 0.0, 128
        %819 = vxpose.xlu0.b32.cont [5/16] 0.0, 128
        %820 = vxpose.xlu0.b32.cont [6/16] 0.0, 128
        %821 = vxpose.xlu0.b32.cont [7/16] 0.0, 128
        %822 = vxpose.xlu0.b32.cont [8/16] 0.0, 128
        %823 = vxpose.xlu0.b32.cont [9/16] 0.0, 128
        %824 = vxpose.xlu0.b32.cont [10/16] 0.0, 128
        %825 = vxpose.xlu0.b32.cont [11/16] 0.0, 128
        %826 = vxpose.xlu0.b32.cont [12/16] 0.0, 128
        %827 = vxpose.xlu0.b32.cont [13/16] 0.0, 128
        %828 = vxpose.xlu0.b32.cont [14/16] 0.0, 128
        %829 = vxpose.xlu0.b32.cont [15/16] 0.0, 128
        %830 = vxpose.xlu0.b32.end [16/16] 0.0, 128
        %v831 = vpop.trf.xlu0
        %v832 = vpop.trf.xlu0
        %v833 = vpop.trf.xlu0
        %v834 = vpop.trf.xlu0
        %v835 = vpop.trf.xlu0
        %v836 = vpop.trf.xlu0
        %v837 = vpop.trf.xlu0
        %v838 = vpop.trf.xlu0
        %v839 = vpop.trf.xlu0
        %v840 = vpop.trf.xlu0
        %v841 = vpop.trf.xlu0
        %v842 = vpop.trf.xlu0
        %v843 = vpop.trf.xlu0
        %v844 = vpop.trf.xlu0
        %v845 = vpop.trf.xlu0
        %v846 = vpop.trf.xlu0
        %847 = vxpose.xlu0.b32.start [1/16] %v772, 128
        %848 = vxpose.xlu0.b32.cont [2/16] 0.0, 128
        %849 = vxpose.xlu0.b32.cont [3/16] 0.0, 128
        %850 = vxpose.xlu0.b32.cont [4/16] 0.0, 128
        %851 = vxpose.xlu0.b32.cont [5/16] 0.0, 128
        %852 = vxpose.xlu0.b32.cont [6/16] 0.0, 128
        %853 = vxpose.xlu0.b32.cont [7/16] 0.0, 128
        %854 = vxpose.xlu0.b32.cont [8/16] 0.0, 128
        %855 = vxpose.xlu0.b32.cont [9/16] 0.0, 128
        %856 = vxpose.xlu0.b32.cont [10/16] 0.0, 128
        %857 = vxpose.xlu0.b32.cont [11/16] 0.0, 128
        %858 = vxpose.xlu0.b32.cont [12/16] 0.0, 128
        %859 = vxpose.xlu0.b32.cont [13/16] 0.0, 128
        %860 = vxpose.xlu0.b32.cont [14/16] 0.0, 128
        %861 = vxpose.xlu0.b32.cont [15/16] 0.0, 128
        %862 = vxpose.xlu0.b32.end [16/16] 0.0, 128
        %v863 = vpop.trf.xlu0
        %v864 = vpop.trf.xlu0
        %v865 = vpop.trf.xlu0
        %v866 = vpop.trf.xlu0
        %v867 = vpop.trf.xlu0
        %v868 = vpop.trf.xlu0
        %v869 = vpop.trf.xlu0
        %v870 = vpop.trf.xlu0
        %v871 = vpop.trf.xlu0
        %v872 = vpop.trf.xlu0
        %v873 = vpop.trf.xlu0
        %v874 = vpop.trf.xlu0
        %v875 = vpop.trf.xlu0
        %v876 = vpop.trf.xlu0
        %v877 = vpop.trf.xlu0
        %v878 = vpop.trf.xlu0
        %879 = vxpose.xlu0.b32.start [1/16] %v774, 128
        %880 = vxpose.xlu0.b32.cont [2/16] 0.0, 128
        %881 = vxpose.xlu0.b32.cont [3/16] 0.0, 128
        %882 = vxpose.xlu0.b32.cont [4/16] 0.0, 128
        %883 = vxpose.xlu0.b32.cont [5/16] 0.0, 128
        %884 = vxpose.xlu0.b32.cont [6/16] 0.0, 128
        %885 = vxpose.xlu0.b32.cont [7/16] 0.0, 128
        %886 = vxpose.xlu0.b32.cont [8/16] 0.0, 128
        %887 = vxpose.xlu0.b32.cont [9/16] 0.0, 128
        %888 = vxpose.xlu0.b32.cont [10/16] 0.0, 128
        %889 = vxpose.xlu0.b32.cont [11/16] 0.0, 128
        %890 = vxpose.xlu0.b32.cont [12/16] 0.0, 128
        %891 = vxpose.xlu0.b32.cont [13/16] 0.0, 128
        %892 = vxpose.xlu0.b32.cont [14/16] 0.0, 128
        %893 = vxpose.xlu0.b32.cont [15/16] 0.0, 128
        %894 = vxpose.xlu0.b32.end [16/16] 0.0, 128
        %v895 = vpop.trf.xlu0
        %v896 = vpop.trf.xlu0
        %v897 = vpop.trf.xlu0
        %v898 = vpop.trf.xlu0
        %v899 = vpop.trf.xlu0
        %v900 = vpop.trf.xlu0
        %v901 = vpop.trf.xlu0
        %v902 = vpop.trf.xlu0
        %v903 = vpop.trf.xlu0
        %v904 = vpop.trf.xlu0
        %v905 = vpop.trf.xlu0
        %v906 = vpop.trf.xlu0
        %v907 = vpop.trf.xlu0
        %v908 = vpop.trf.xlu0
        %v909 = vpop.trf.xlu0
        %v910 = vpop.trf.xlu0
        %911 = vxpose.xlu0.b32.start [1/16] %v776, 128
        %912 = vxpose.xlu0.b32.cont [2/16] 0.0, 128
        %913 = vxpose.xlu0.b32.cont [3/16] 0.0, 128
        %914 = vxpose.xlu0.b32.cont [4/16] 0.0, 128
        %915 = vxpose.xlu0.b32.cont [5/16] 0.0, 128
        %916 = vxpose.xlu0.b32.cont [6/16] 0.0, 128
        %917 = vxpose.xlu0.b32.cont [7/16] 0.0, 128
        %918 = vxpose.xlu0.b32.cont [8/16] 0.0, 128
        %919 = vxpose.xlu0.b32.cont [9/16] 0.0, 128
        %920 = vxpose.xlu0.b32.cont [10/16] 0.0, 128
        %921 = vxpose.xlu0.b32.cont [11/16] 0.0, 128
        %922 = vxpose.xlu0.b32.cont [12/16] 0.0, 128
        %923 = vxpose.xlu0.b32.cont [13/16] 0.0, 128
        %924 = vxpose.xlu0.b32.cont [14/16] 0.0, 128
        %925 = vxpose.xlu0.b32.cont [15/16] 0.0, 128
        %926 = vxpose.xlu0.b32.end [16/16] 0.0, 128
        %v927 = vpop.trf.xlu0
        %v928 = vpop.trf.xlu0
        %v929 = vpop.trf.xlu0
        %v930 = vpop.trf.xlu0
        %v931 = vpop.trf.xlu0
        %v932 = vpop.trf.xlu0
        %v933 = vpop.trf.xlu0
        %v934 = vpop.trf.xlu0
        %v935 = vpop.trf.xlu0
        %v936 = vpop.trf.xlu0
        %v937 = vpop.trf.xlu0
        %v938 = vpop.trf.xlu0
        %v939 = vpop.trf.xlu0
        %v940 = vpop.trf.xlu0
        %v941 = vpop.trf.xlu0
        %v942 = vpop.trf.xlu0
        %943 = vxpose.xlu0.b32.start [1/16] %v778, 128
        %944 = vxpose.xlu0.b32.cont [2/16] 0.0, 128
        %945 = vxpose.xlu0.b32.cont [3/16] 0.0, 128
        %946 = vxpose.xlu0.b32.cont [4/16] 0.0, 128
        %947 = vxpose.xlu0.b32.cont [5/16] 0.0, 128
        %948 = vxpose.xlu0.b32.cont [6/16] 0.0, 128
        %949 = vxpose.xlu0.b32.cont [7/16] 0.0, 128
        %950 = vxpose.xlu0.b32.cont [8/16] 0.0, 128
        %951 = vxpose.xlu0.b32.cont [9/16] 0.0, 128
        %952 = vxpose.xlu0.b32.cont [10/16] 0.0, 128
        %953 = vxpose.xlu0.b32.cont [11/16] 0.0, 128
        %954 = vxpose.xlu0.b32.cont [12/16] 0.0, 128
        %955 = vxpose.xlu0.b32.cont [13/16] 0.0, 128
        %956 = vxpose.xlu0.b32.cont [14/16] 0.0, 128
        %957 = vxpose.xlu0.b32.cont [15/16] 0.0, 128
        %958 = vxpose.xlu0.b32.end [16/16] 0.0, 128
        %v959 = vpop.trf.xlu0
        %v960 = vpop.trf.xlu0
        %v961 = vpop.trf.xlu0
        %v962 = vpop.trf.xlu0
        %v963 = vpop.trf.xlu0
        %v964 = vpop.trf.xlu0
        %v965 = vpop.trf.xlu0
        %v966 = vpop.trf.xlu0
        %v967 = vpop.trf.xlu0
        %v968 = vpop.trf.xlu0
        %v969 = vpop.trf.xlu0
        %v970 = vpop.trf.xlu0
        %v971 = vpop.trf.xlu0
        %v972 = vpop.trf.xlu0
        %v973 = vpop.trf.xlu0
        %v974 = vpop.trf.xlu0
        %975 = vxpose.xlu0.b32.start [1/16] %v780, 128
        %976 = vxpose.xlu0.b32.cont [2/16] 0.0, 128
        %977 = vxpose.xlu0.b32.cont [3/16] 0.0, 128
        %978 = vxpose.xlu0.b32.cont [4/16] 0.0, 128
        %979 = vxpose.xlu0.b32.cont [5/16] 0.0, 128
        %980 = vxpose.xlu0.b32.cont [6/16] 0.0, 128
        %981 = vxpose.xlu0.b32.cont [7/16] 0.0, 128
        %982 = vxpose.xlu0.b32.cont [8/16] 0.0, 128
        %983 = vxpose.xlu0.b32.cont [9/16] 0.0, 128
        %984 = vxpose.xlu0.b32.cont [10/16] 0.0, 128
        %985 = vxpose.xlu0.b32.cont [11/16] 0.0, 128
        %986 = vxpose.xlu0.b32.cont [12/16] 0.0, 128
        %987 = vxpose.xlu0.b32.cont [13/16] 0.0, 128
        %988 = vxpose.xlu0.b32.cont [14/16] 0.0, 128
        %989 = vxpose.xlu0.b32.cont [15/16] 0.0, 128
        %990 = vxpose.xlu0.b32.end [16/16] 0.0, 128
        %v991 = vpop.trf.xlu0
        %v992 = vpop.trf.xlu0
        %v993 = vpop.trf.xlu0
        %v994 = vpop.trf.xlu0
        %v995 = vpop.trf.xlu0
        %v996 = vpop.trf.xlu0
        %v997 = vpop.trf.xlu0
        %v998 = vpop.trf.xlu0
        %v999 = vpop.trf.xlu0
        %v1000 = vpop.trf.xlu0
        %v1001 = vpop.trf.xlu0
        %v1002 = vpop.trf.xlu0
        %v1003 = vpop.trf.xlu0
        %v1004 = vpop.trf.xlu0
        %v1005 = vpop.trf.xlu0
        %v1006 = vpop.trf.xlu0
        %1007 = vxpose.xlu0.b32.start [1/16] %v782, 128
        %1008 = vxpose.xlu0.b32.cont [2/16] 0.0, 128
        %1009 = vxpose.xlu0.b32.cont [3/16] 0.0, 128
        %1010 = vxpose.xlu0.b32.cont [4/16] 0.0, 128
        %1011 = vxpose.xlu0.b32.cont [5/16] 0.0, 128
        %1012 = vxpose.xlu0.b32.cont [6/16] 0.0, 128
        %1013 = vxpose.xlu0.b32.cont [7/16] 0.0, 128
        %1014 = vxpose.xlu0.b32.cont [8/16] 0.0, 128
        %1015 = vxpose.xlu0.b32.cont [9/16] 0.0, 128
        %1016 = vxpose.xlu0.b32.cont [10/16] 0.0, 128
        %1017 = vxpose.xlu0.b32.cont [11/16] 0.0, 128
        %1018 = vxpose.xlu0.b32.cont [12/16] 0.0, 128
        %1019 = vxpose.xlu0.b32.cont [13/16] 0.0, 128
        %1020 = vxpose.xlu0.b32.cont [14/16] 0.0, 128
        %1021 = vxpose.xlu0.b32.cont [15/16] 0.0, 128
        %1022 = vxpose.xlu0.b32.end [16/16] 0.0, 128
        %v1023 = vpop.trf.xlu0
        %v1024 = vpop.trf.xlu0
        %v1025 = vpop.trf.xlu0
        %v1026 = vpop.trf.xlu0
        %v1027 = vpop.trf.xlu0
        %v1028 = vpop.trf.xlu0
        %v1029 = vpop.trf.xlu0
        %v1030 = vpop.trf.xlu0
        %v1031 = vpop.trf.xlu0
        %v1032 = vpop.trf.xlu0
        %v1033 = vpop.trf.xlu0
        %v1034 = vpop.trf.xlu0
        %v1035 = vpop.trf.xlu0
        %v1036 = vpop.trf.xlu0
        %v1037 = vpop.trf.xlu0
        %v1038 = vpop.trf.xlu0
        %v1039 = vrot.slane %v863, 4
        %v1040 = vsel %vm293, %v1039, %v799
        %v1042 = vunpack.c.l.s4 1983009808
        %v1043 = vunpack.c.0.s8 %v1042
        %v1044 = vperm.slane %v1040, %v1043
        %v1045 = vrot.slane %v895, 4
        %v1046 = vsel %vm293, %v1045, %v831
        %v1048 = vunpack.c.l.s4 1983009808
        %v1049 = vunpack.c.0.s8 %v1048
        %v1050 = vperm.slane %v1046, %v1049
        %v1051 = vrot.slane %v991, 4
        %v1052 = vsel %vm293, %v1051, %v927
        %v1054 = vunpack.c.l.s4 1983009808
        %v1055 = vunpack.c.0.s8 %v1054
        %v1056 = vperm.slane %v1052, %v1055
        %v1057 = vrot.slane %v1023, 4
        %v1058 = vsel %vm293, %v1057, %v959
        %v1060 = vunpack.c.l.s4 1983009808
        %v1061 = vunpack.c.0.s8 %v1060
        %v1062 = vperm.slane %v1058, %v1061
        %v1063 = vrot.slane %v1050, 4
        %v1064 = vsel %vm293, %v1063, %v1044
        %v1065 = vrot.slane %v1044, 4
        %v1066 = vsel %vm293, %v1050, %v1065
        %v1068 = vunpack.c.l.s4 1934713408
        %v1069 = vunpack.c.0.s8 %v1068
        %v1070 = vperm.slane %v1064, %v1069
        %v1072 = vunpack.c.l.s4 1934713408
        %v1073 = vunpack.c.0.s8 %v1072
        %v1074 = vperm.slane %v1066, %v1073
        %v1075 = vrot.slane %v1062, 4
        %v1076 = vsel %vm293, %v1075, %v1056
        %v1077 = vrot.slane %v1056, 4
        %v1078 = vsel %vm293, %v1062, %v1077
        %v1080 = vunpack.c.l.s4 1934713408
        %v1081 = vunpack.c.0.s8 %v1080
        %v1082 = vperm.slane %v1076, %v1081
        %v1084 = vunpack.c.l.s4 1934713408
        %v1085 = vunpack.c.0.s8 %v1084
        %v1086 = vperm.slane %v1078, %v1085
        %v1087 = vrot.slane %v1082, 4
        %v1088 = vsel %vm293, %v1087, %v1070
        %v1089 = vrot.slane %v1070, 4
        %v1090 = vsel %vm293, %v1082, %v1089
        %v1091 = vrot.slane %v1086, 4
        %v1092 = vsel %vm293, %v1091, %v1074
        %v1093 = vrot.slane %v1074, 4
        %v1094 = vsel %vm293, %v1086, %v1093
        %vm1095 = vcmask 64512
        %v1096 = vsel %vm1095, %v272, 0
        %1098 = vmatpush.msra.mxu0 0.0
        %1099 = vmatpush.msra.mxu0 0.0
        %1100 = vmatpush.msra.mxu0 0.0
        %1101 = vmatpush.msra.mxu0 0.0
        %1102 = vmatpush.msra.mxu0 0.0
        %1103 = vmatpush.msra.mxu0 0.0
        %1104 = vmatpush.msra.mxu0 0.0
        %1105 = vmatpush.msra.mxu0 0.0
        %1106 = vmatpush.msra.mxu0 0.0
        %1107 = vmatpush.msra.mxu0 0.0
        %1108 = vmatpush.msra.mxu0 0.0
        %1109 = vmatpush.msra.mxu0 0.0
        %1110 = vmatpush.msra.mxu0 0.0
        %1111 = vmatpush.msra.mxu0 0.0
        %1112 = vmatpush.msra.mxu0 0.0
        %1113 = vmatpush.msra.mxu0 %v1088
        %1114 = vmatmul.f32.gmra.mxu0 %v1096
        %v1115 = vpop.f32.mrf.mxu0
        %v1116 = vadd.f32 0.0, %v1115
        %1117 = vdwg.mxu0
        %v1118 = vsel %vm1095, %v277, 0
        %1120 = vmatpush.msra.mxu0 0.0
        %1121 = vmatpush.msra.mxu0 0.0
        %1122 = vmatpush.msra.mxu0 0.0
        %1123 = vmatpush.msra.mxu0 0.0
        %1124 = vmatpush.msra.mxu0 0.0
        %1125 = vmatpush.msra.mxu0 0.0
        %1126 = vmatpush.msra.mxu0 0.0
        %1127 = vmatpush.msra.mxu0 0.0
        %1128 = vmatpush.msra.mxu0 0.0
        %1129 = vmatpush.msra.mxu0 0.0
        %1130 = vmatpush.msra.mxu0 0.0
        %1131 = vmatpush.msra.mxu0 0.0
        %1132 = vmatpush.msra.mxu0 0.0
        %1133 = vmatpush.msra.mxu0 0.0
        %1134 = vmatpush.msra.mxu0 0.0
        %1135 = vmatpush.msra.mxu0 %v1090
        %1136 = vmatmul.f32.gmra.mxu0 %v1118
        %v1137 = vpop.f32.mrf.mxu0
        %v1138 = vadd.f32 0.0, %v1137
        %1139 = vdwg.mxu0
        %v1140 = vsel %vm1095, %v279, 0
        %1142 = vmatpush.msra.mxu0 0.0
        %1143 = vmatpush.msra.mxu0 0.0
        %1144 = vmatpush.msra.mxu0 0.0
        %1145 = vmatpush.msra.mxu0 0.0
        %1146 = vmatpush.msra.mxu0 0.0
        %1147 = vmatpush.msra.mxu0 0.0
        %1148 = vmatpush.msra.mxu0 0.0
        %1149 = vmatpush.msra.mxu0 0.0
        %1150 = vmatpush.msra.mxu0 0.0
        %1151 = vmatpush.msra.mxu0 0.0
        %1152 = vmatpush.msra.mxu0 0.0
        %1153 = vmatpush.msra.mxu0 0.0
        %1154 = vmatpush.msra.mxu0 0.0
        %1155 = vmatpush.msra.mxu0 0.0
        %1156 = vmatpush.msra.mxu0 0.0
        %1157 = vmatpush.msra.mxu0 %v1092
        %1158 = vmatmul.f32.gmra.mxu0 %v1140
        %v1159 = vpop.f32.mrf.mxu0
        %v1160 = vadd.f32 0.0, %v1159
        %1161 = vdwg.mxu0
        %v1162 = vsel %vm1095, %v281, 0
        %1164 = vmatpush.msra.mxu0 0.0
        %1165 = vmatpush.msra.mxu0 0.0
        %1166 = vmatpush.msra.mxu0 0.0
        %1167 = vmatpush.msra.mxu0 0.0
        %1168 = vmatpush.msra.mxu0 0.0
        %1169 = vmatpush.msra.mxu0 0.0
        %1170 = vmatpush.msra.mxu0 0.0
        %1171 = vmatpush.msra.mxu0 0.0
        %1172 = vmatpush.msra.mxu0 0.0
        %1173 = vmatpush.msra.mxu0 0.0
        %1174 = vmatpush.msra.mxu0 0.0
        %1175 = vmatpush.msra.mxu0 0.0
        %1176 = vmatpush.msra.mxu0 0.0
        %1177 = vmatpush.msra.mxu0 0.0
        %1178 = vmatpush.msra.mxu0 0.0
        %1179 = vmatpush.msra.mxu0 %v1094
        %1180 = vmatmul.f32.gmra.mxu0 %v1162
        %v1181 = vpop.f32.mrf.mxu0
        %v1182 = vadd.f32 0.0, %v1181
        %1183 = vdwg.mxu0
        %v1184 = vsel %vm1095, %v1116, -inf
        %1185 = vmax.xlane.f32.xlu0 %v1184
        %v1186 = vpop.xlane.xlu0 %1185
        %v1187 = vsel %vm1095, %v1138, -inf
        %1188 = vmax.xlane.f32.xlu0 %v1187
        %v1189 = vpop.xlane.xlu0 %1188
        %v1190 = vsel %vm1095, %v1160, -inf
        %1191 = vmax.xlane.f32.xlu0 %v1190
        %v1192 = vpop.xlane.xlu0 %1191
        %v1193 = vsel %vm1095, %v1182, -inf
        %1194 = vmax.xlane.f32.xlu0 %v1193
        %v1195 = vpop.xlane.xlu0 %1194
        %v1196 = vsub.f32 %v1116, %v1186
        %v1197 = vsub.f32 %v1138, %v1189
        %v1198 = vsub.f32 %v1160, %v1192
        %v1199 = vsub.f32 %v1182, %v1195
        %v1200 = vmul.f32 %v1196, 1.442695
        %v1201 = vpow.pop %v1200
        %v1202 = vmul.f32 %v1197, 1.442695
        %v1203 = vpow.pop %v1202
        %v1204 = vmul.f32 %v1198, 1.442695
        %v1205 = vpow.pop %v1204
        %v1206 = vmul.f32 %v1199, 1.442695
        %v1207 = vpow.pop %v1206
        %v1208 = vsel %vm1095, %v1201, 0.0
        %1209 = vadd.xlane.f32.xlu0 %v1208
        %v1210 = vpop.xlane.xlu0 %1209
        %v1211 = vsel %vm1095, %v1203, 0.0
        %1212 = vadd.xlane.f32.xlu0 %v1211
        %v1213 = vpop.xlane.xlu0 %1212
        %v1214 = vsel %vm1095, %v1205, 0.0
        %1215 = vadd.xlane.f32.xlu0 %v1214
        %v1216 = vpop.xlane.xlu0 %1215
        %v1217 = vsel %vm1095, %v1207, 0.0
        %1218 = vadd.xlane.f32.xlu0 %v1217
        %v1219 = vpop.xlane.xlu0 %1218
        %v1220 = vrcp.pop %v1210
        %v1221 = vmul.f32 %v1210, %v1220
        %v1222 = vsub.f32 1.0, %v1221
        %v1223 = vmul.f32 %v1220, %v1222
        %v1224 = vadd.f32 %v1220, %v1223
        %vm1225 = vweird.f32 %v1210
        %vm1226 = vweird.f32 %v1220
        %vm1227 = vmor %vm1225, %vm1226
        %v1228 = vsel %vm1227, %v1220, %v1224
        %v1229 = vand.u32 2147483647, %v1210
        %vm1230 = vcmp.eq.f32.partialorder %v1229, 8.507059e+37
        %v1231 = vand.u32 %v1210, 2147483648
        %v1232 = vor.u32 1.1754944e-38, %v1231
        %v1233 = vsel %vm1230, %v1232, %v1228
        %v1234 = vrcp.pop %v1213
        %v1235 = vmul.f32 %v1213, %v1234
        %v1236 = vsub.f32 1.0, %v1235
        %v1237 = vmul.f32 %v1234, %v1236
        %v1238 = vadd.f32 %v1234, %v1237
        %vm1239 = vweird.f32 %v1213
        %vm1240 = vweird.f32 %v1234
        %vm1241 = vmor %vm1239, %vm1240
        %v1242 = vsel %vm1241, %v1234, %v1238
        %v1243 = vand.u32 2147483647, %v1213
        %vm1244 = vcmp.eq.f32.partialorder %v1243, 8.507059e+37
        %v1245 = vand.u32 %v1213, 2147483648
        %v1246 = vor.u32 1.1754944e-38, %v1245
        %v1247 = vsel %vm1244, %v1246, %v1242
        %v1248 = vrcp.pop %v1216
        %v1249 = vmul.f32 %v1216, %v1248
        %v1250 = vsub.f32 1.0, %v1249
        %v1251 = vmul.f32 %v1248, %v1250
        %v1252 = vadd.f32 %v1248, %v1251
        %vm1253 = vweird.f32 %v1216
        %vm1254 = vweird.f32 %v1248
        %vm1255 = vmor %vm1253, %vm1254
        %v1256 = vsel %vm1255, %v1248, %v1252
        %v1257 = vand.u32 2147483647, %v1216
        %vm1258 = vcmp.eq.f32.partialorder %v1257, 8.507059e+37
        %v1259 = vand.u32 %v1216, 2147483648
        %v1260 = vor.u32 1.1754944e-38, %v1259
        %v1261 = vsel %vm1258, %v1260, %v1256
        %v1262 = vrcp.pop %v1219
        %v1263 = vmul.f32 %v1219, %v1262
        %v1264 = vsub.f32 1.0, %v1263
        %v1265 = vmul.f32 %v1262, %v1264
        %v1266 = vadd.f32 %v1262, %v1265
        %vm1267 = vweird.f32 %v1219
        %vm1268 = vweird.f32 %v1262
        %vm1269 = vmor %vm1267, %vm1268
        %v1270 = vsel %vm1269, %v1262, %v1266
        %v1271 = vand.u32 2147483647, %v1219
        %vm1272 = vcmp.eq.f32.partialorder %v1271, 8.507059e+37
        %v1273 = vand.u32 %v1219, 2147483648
        %v1274 = vor.u32 1.1754944e-38, %v1273
        %v1275 = vsel %vm1272, %v1274, %v1270
        %v1276 = vmul.f32 %v1201, %v1233
        %v1277 = vmul.f32 %v1203, %v1247
        %v1278 = vmul.f32 %v1205, %v1261
        %v1279 = vmul.f32 %v1207, %v1275
        %1280 = vxpose.xlu0.b32.start [1/16] %v390, 128
        %1281 = vxpose.xlu0.b32.cont [2/16] 0.0, 128
        %1282 = vxpose.xlu0.b32.cont [3/16] 0.0, 128
        %1283 = vxpose.xlu0.b32.cont [4/16] 0.0, 128
        %1284 = vxpose.xlu0.b32.cont [5/16] 0.0, 128
        %1285 = vxpose.xlu0.b32.cont [6/16] 0.0, 128
        %1286 = vxpose.xlu0.b32.cont [7/16] 0.0, 128
        %1287 = vxpose.xlu0.b32.cont [8/16] 0.0, 128
        %1288 = vxpose.xlu0.b32.cont [9/16] 0.0, 128
        %1289 = vxpose.xlu0.b32.cont [10/16] 0.0, 128
        %1290 = vxpose.xlu0.b32.cont [11/16] 0.0, 128
        %1291 = vxpose.xlu0.b32.cont [12/16] 0.0, 128
        %1292 = vxpose.xlu0.b32.cont [13/16] 0.0, 128
        %1293 = vxpose.xlu0.b32.cont [14/16] 0.0, 128
        %1294 = vxpose.xlu0.b32.cont [15/16] 0.0, 128
        %1295 = vxpose.xlu0.b32.end [16/16] 0.0, 128
        %v1296 = vpop.trf.xlu0
        %v1297 = vpop.trf.xlu0
        %v1298 = vpop.trf.xlu0
        %v1299 = vpop.trf.xlu0
        %v1300 = vpop.trf.xlu0
        %v1301 = vpop.trf.xlu0
        %v1302 = vpop.trf.xlu0
        %v1303 = vpop.trf.xlu0
        %v1304 = vpop.trf.xlu0
        %v1305 = vpop.trf.xlu0
        %v1306 = vpop.trf.xlu0
        %v1307 = vpop.trf.xlu0
        %v1308 = vpop.trf.xlu0
        %v1309 = vpop.trf.xlu0
        %v1310 = vpop.trf.xlu0
        %v1311 = vpop.trf.xlu0
        %1312 = vxpose.xlu0.b32.start [1/16] %v408, 128
        %1313 = vxpose.xlu0.b32.cont [2/16] 0.0, 128
        %1314 = vxpose.xlu0.b32.cont [3/16] 0.0, 128
        %1315 = vxpose.xlu0.b32.cont [4/16] 0.0, 128
        %1316 = vxpose.xlu0.b32.cont [5/16] 0.0, 128
        %1317 = vxpose.xlu0.b32.cont [6/16] 0.0, 128
        %1318 = vxpose.xlu0.b32.cont [7/16] 0.0, 128
        %1319 = vxpose.xlu0.b32.cont [8/16] 0.0, 128
        %1320 = vxpose.xlu0.b32.cont [9/16] 0.0, 128
        %1321 = vxpose.xlu0.b32.cont [10/16] 0.0, 128
        %1322 = vxpose.xlu0.b32.cont [11/16] 0.0, 128
        %1323 = vxpose.xlu0.b32.cont [12/16] 0.0, 128
        %1324 = vxpose.xlu0.b32.cont [13/16] 0.0, 128
        %1325 = vxpose.xlu0.b32.cont [14/16] 0.0, 128
        %1326 = vxpose.xlu0.b32.cont [15/16] 0.0, 128
        %1327 = vxpose.xlu0.b32.end [16/16] 0.0, 128
        %v1328 = vpop.trf.xlu0
        %v1329 = vpop.trf.xlu0
        %v1330 = vpop.trf.xlu0
        %v1331 = vpop.trf.xlu0
        %v1332 = vpop.trf.xlu0
        %v1333 = vpop.trf.xlu0
        %v1334 = vpop.trf.xlu0
        %v1335 = vpop.trf.xlu0
        %v1336 = vpop.trf.xlu0
        %v1337 = vpop.trf.xlu0
        %v1338 = vpop.trf.xlu0
        %v1339 = vpop.trf.xlu0
        %v1340 = vpop.trf.xlu0
        %v1341 = vpop.trf.xlu0
        %v1342 = vpop.trf.xlu0
        %v1343 = vpop.trf.xlu0
        %1344 = vxpose.xlu0.b32.start [1/16] %v394, 128
        %1345 = vxpose.xlu0.b32.cont [2/16] 0.0, 128
        %1346 = vxpose.xlu0.b32.cont [3/16] 0.0, 128
        %1347 = vxpose.xlu0.b32.cont [4/16] 0.0, 128
        %1348 = vxpose.xlu0.b32.cont [5/16] 0.0, 128
        %1349 = vxpose.xlu0.b32.cont [6/16] 0.0, 128
        %1350 = vxpose.xlu0.b32.cont [7/16] 0.0, 128
        %1351 = vxpose.xlu0.b32.cont [8/16] 0.0, 128
        %1352 = vxpose.xlu0.b32.cont [9/16] 0.0, 128
        %1353 = vxpose.xlu0.b32.cont [10/16] 0.0, 128
        %1354 = vxpose.xlu0.b32.cont [11/16] 0.0, 128
        %1355 = vxpose.xlu0.b32.cont [12/16] 0.0, 128
        %1356 = vxpose.xlu0.b32.cont [13/16] 0.0, 128
        %1357 = vxpose.xlu0.b32.cont [14/16] 0.0, 128
        %1358 = vxpose.xlu0.b32.cont [15/16] 0.0, 128
        %1359 = vxpose.xlu0.b32.end [16/16] 0.0, 128
        %v1360 = vpop.trf.xlu0
        %v1361 = vpop.trf.xlu0
        %v1362 = vpop.trf.xlu0
        %v1363 = vpop.trf.xlu0
        %v1364 = vpop.trf.xlu0
        %v1365 = vpop.trf.xlu0
        %v1366 = vpop.trf.xlu0
        %v1367 = vpop.trf.xlu0
        %v1368 = vpop.trf.xlu0
        %v1369 = vpop.trf.xlu0
        %v1370 = vpop.trf.xlu0
        %v1371 = vpop.trf.xlu0
        %v1372 = vpop.trf.xlu0
        %v1373 = vpop.trf.xlu0
        %v1374 = vpop.trf.xlu0
        %v1375 = vpop.trf.xlu0
        %1376 = vxpose.xlu0.b32.start [1/16] %v410, 128
        %1377 = vxpose.xlu0.b32.cont [2/16] 0.0, 128
        %1378 = vxpose.xlu0.b32.cont [3/16] 0.0, 128
        %1379 = vxpose.xlu0.b32.cont [4/16] 0.0, 128
        %1380 = vxpose.xlu0.b32.cont [5/16] 0.0, 128
        %1381 = vxpose.xlu0.b32.cont [6/16] 0.0, 128
        %1382 = vxpose.xlu0.b32.cont [7/16] 0.0, 128
        %1383 = vxpose.xlu0.b32.cont [8/16] 0.0, 128
        %1384 = vxpose.xlu0.b32.cont [9/16] 0.0, 128
        %1385 = vxpose.xlu0.b32.cont [10/16] 0.0, 128
        %1386 = vxpose.xlu0.b32.cont [11/16] 0.0, 128
        %1387 = vxpose.xlu0.b32.cont [12/16] 0.0, 128
        %1388 = vxpose.xlu0.b32.cont [13/16] 0.0, 128
        %1389 = vxpose.xlu0.b32.cont [14/16] 0.0, 128
        %1390 = vxpose.xlu0.b32.cont [15/16] 0.0, 128
        %1391 = vxpose.xlu0.b32.end [16/16] 0.0, 128
        %v1392 = vpop.trf.xlu0
        %v1393 = vpop.trf.xlu0
        %v1394 = vpop.trf.xlu0
        %v1395 = vpop.trf.xlu0
        %v1396 = vpop.trf.xlu0
        %v1397 = vpop.trf.xlu0
        %v1398 = vpop.trf.xlu0
        %v1399 = vpop.trf.xlu0
        %v1400 = vpop.trf.xlu0
        %v1401 = vpop.trf.xlu0
        %v1402 = vpop.trf.xlu0
        %v1403 = vpop.trf.xlu0
        %v1404 = vpop.trf.xlu0
        %v1405 = vpop.trf.xlu0
        %v1406 = vpop.trf.xlu0
        %v1407 = vpop.trf.xlu0
        %1408 = vxpose.xlu0.b32.start [1/16] %v402, 128
        %1409 = vxpose.xlu0.b32.cont [2/16] 0.0, 128
        %1410 = vxpose.xlu0.b32.cont [3/16] 0.0, 128
        %1411 = vxpose.xlu0.b32.cont [4/16] 0.0, 128
        %1412 = vxpose.xlu0.b32.cont [5/16] 0.0, 128
        %1413 = vxpose.xlu0.b32.cont [6/16] 0.0, 128
        %1414 = vxpose.xlu0.b32.cont [7/16] 0.0, 128
        %1415 = vxpose.xlu0.b32.cont [8/16] 0.0, 128
        %1416 = vxpose.xlu0.b32.cont [9/16] 0.0, 128
        %1417 = vxpose.xlu0.b32.cont [10/16] 0.0, 128
        %1418 = vxpose.xlu0.b32.cont [11/16] 0.0, 128
        %1419 = vxpose.xlu0.b32.cont [12/16] 0.0, 128
        %1420 = vxpose.xlu0.b32.cont [13/16] 0.0, 128
        %1421 = vxpose.xlu0.b32.cont [14/16] 0.0, 128
        %1422 = vxpose.xlu0.b32.cont [15/16] 0.0, 128
        %1423 = vxpose.xlu0.b32.end [16/16] 0.0, 128
        %v1424 = vpop.trf.xlu0
        %v1425 = vpop.trf.xlu0
        %v1426 = vpop.trf.xlu0
        %v1427 = vpop.trf.xlu0
        %v1428 = vpop.trf.xlu0
        %v1429 = vpop.trf.xlu0
        %v1430 = vpop.trf.xlu0
        %v1431 = vpop.trf.xlu0
        %v1432 = vpop.trf.xlu0
        %v1433 = vpop.trf.xlu0
        %v1434 = vpop.trf.xlu0
        %v1435 = vpop.trf.xlu0
        %v1436 = vpop.trf.xlu0
        %v1437 = vpop.trf.xlu0
        %v1438 = vpop.trf.xlu0
        %v1439 = vpop.trf.xlu0
        %1440 = vxpose.xlu0.b32.start [1/16] %v412, 128
        %1441 = vxpose.xlu0.b32.cont [2/16] 0.0, 128
        %1442 = vxpose.xlu0.b32.cont [3/16] 0.0, 128
        %1443 = vxpose.xlu0.b32.cont [4/16] 0.0, 128
        %1444 = vxpose.xlu0.b32.cont [5/16] 0.0, 128
        %1445 = vxpose.xlu0.b32.cont [6/16] 0.0, 128
        %1446 = vxpose.xlu0.b32.cont [7/16] 0.0, 128
        %1447 = vxpose.xlu0.b32.cont [8/16] 0.0, 128
        %1448 = vxpose.xlu0.b32.cont [9/16] 0.0, 128
        %1449 = vxpose.xlu0.b32.cont [10/16] 0.0, 128
        %1450 = vxpose.xlu0.b32.cont [11/16] 0.0, 128
        %1451 = vxpose.xlu0.b32.cont [12/16] 0.0, 128
        %1452 = vxpose.xlu0.b32.cont [13/16] 0.0, 128
        %1453 = vxpose.xlu0.b32.cont [14/16] 0.0, 128
        %1454 = vxpose.xlu0.b32.cont [15/16] 0.0, 128
        %1455 = vxpose.xlu0.b32.end [16/16] 0.0, 128
        %v1456 = vpop.trf.xlu0
        %v1457 = vpop.trf.xlu0
        %v1458 = vpop.trf.xlu0
        %v1459 = vpop.trf.xlu0
        %v1460 = vpop.trf.xlu0
        %v1461 = vpop.trf.xlu0
        %v1462 = vpop.trf.xlu0
        %v1463 = vpop.trf.xlu0
        %v1464 = vpop.trf.xlu0
        %v1465 = vpop.trf.xlu0
        %v1466 = vpop.trf.xlu0
        %v1467 = vpop.trf.xlu0
        %v1468 = vpop.trf.xlu0
        %v1469 = vpop.trf.xlu0
        %v1470 = vpop.trf.xlu0
        %v1471 = vpop.trf.xlu0
        %1472 = vxpose.xlu0.b32.start [1/16] %v406, 128
        %1473 = vxpose.xlu0.b32.cont [2/16] 0.0, 128
        %1474 = vxpose.xlu0.b32.cont [3/16] 0.0, 128
        %1475 = vxpose.xlu0.b32.cont [4/16] 0.0, 128
        %1476 = vxpose.xlu0.b32.cont [5/16] 0.0, 128
        %1477 = vxpose.xlu0.b32.cont [6/16] 0.0, 128
        %1478 = vxpose.xlu0.b32.cont [7/16] 0.0, 128
        %1479 = vxpose.xlu0.b32.cont [8/16] 0.0, 128
        %1480 = vxpose.xlu0.b32.cont [9/16] 0.0, 128
        %1481 = vxpose.xlu0.b32.cont [10/16] 0.0, 128
        %1482 = vxpose.xlu0.b32.cont [11/16] 0.0, 128
        %1483 = vxpose.xlu0.b32.cont [12/16] 0.0, 128
        %1484 = vxpose.xlu0.b32.cont [13/16] 0.0, 128
        %1485 = vxpose.xlu0.b32.cont [14/16] 0.0, 128
        %1486 = vxpose.xlu0.b32.cont [15/16] 0.0, 128
        %1487 = vxpose.xlu0.b32.end [16/16] 0.0, 128
        %v1488 = vpop.trf.xlu0
        %v1489 = vpop.trf.xlu0
        %v1490 = vpop.trf.xlu0
        %v1491 = vpop.trf.xlu0
        %v1492 = vpop.trf.xlu0
        %v1493 = vpop.trf.xlu0
        %v1494 = vpop.trf.xlu0
        %v1495 = vpop.trf.xlu0
        %v1496 = vpop.trf.xlu0
        %v1497 = vpop.trf.xlu0
        %v1498 = vpop.trf.xlu0
        %v1499 = vpop.trf.xlu0
        %v1500 = vpop.trf.xlu0
        %v1501 = vpop.trf.xlu0
        %v1502 = vpop.trf.xlu0
        %v1503 = vpop.trf.xlu0
        %1504 = vxpose.xlu0.b32.start [1/16] %v414, 128
        %1505 = vxpose.xlu0.b32.cont [2/16] 0.0, 128
        %1506 = vxpose.xlu0.b32.cont [3/16] 0.0, 128
        %1507 = vxpose.xlu0.b32.cont [4/16] 0.0, 128
        %1508 = vxpose.xlu0.b32.cont [5/16] 0.0, 128
        %1509 = vxpose.xlu0.b32.cont [6/16] 0.0, 128
        %1510 = vxpose.xlu0.b32.cont [7/16] 0.0, 128
        %1511 = vxpose.xlu0.b32.cont [8/16] 0.0, 128
        %1512 = vxpose.xlu0.b32.cont [9/16] 0.0, 128
        %1513 = vxpose.xlu0.b32.cont [10/16] 0.0, 128
        %1514 = vxpose.xlu0.b32.cont [11/16] 0.0, 128
        %1515 = vxpose.xlu0.b32.cont [12/16] 0.0, 128
        %1516 = vxpose.xlu0.b32.cont [13/16] 0.0, 128
        %1517 = vxpose.xlu0.b32.cont [14/16] 0.0, 128
        %1518 = vxpose.xlu0.b32.cont [15/16] 0.0, 128
        %1519 = vxpose.xlu0.b32.end [16/16] 0.0, 128
        %v1520 = vpop.trf.xlu0
        %v1521 = vpop.trf.xlu0
        %v1522 = vpop.trf.xlu0
        %v1523 = vpop.trf.xlu0
        %v1524 = vpop.trf.xlu0
        %v1525 = vpop.trf.xlu0
        %v1526 = vpop.trf.xlu0
        %v1527 = vpop.trf.xlu0
        %v1528 = vpop.trf.xlu0
        %v1529 = vpop.trf.xlu0
        %v1530 = vpop.trf.xlu0
        %v1531 = vpop.trf.xlu0
        %v1532 = vpop.trf.xlu0
        %v1533 = vpop.trf.xlu0
        %v1534 = vpop.trf.xlu0
        %v1535 = vpop.trf.xlu0
        %v1536 = vrot.slane %v1360, 4
        %v1537 = vsel %vm293, %v1536, %v1296
        %v1538 = vrot.slane %v1296, 4
        %v1539 = vsel %vm293, %v1360, %v1538
        %v1541 = vunpack.c.l.s4 1983009808
        %v1542 = vunpack.c.0.s8 %v1541
        %v1543 = vperm.slane %v1537, %v1542
        %v1545 = vunpack.c.l.s4 1983009808
        %v1546 = vunpack.c.0.s8 %v1545
        %v1547 = vperm.slane %v1539, %v1546
        %v1548 = vrot.slane %v1392, 4
        %v1549 = vsel %vm293, %v1548, %v1328
        %v1550 = vrot.slane %v1328, 4
        %v1551 = vsel %vm293, %v1392, %v1550
        %v1553 = vunpack.c.l.s4 1983009808
        %v1554 = vunpack.c.0.s8 %v1553
        %v1555 = vperm.slane %v1549, %v1554
        %v1557 = vunpack.c.l.s4 1983009808
        %v1558 = vunpack.c.0.s8 %v1557
        %v1559 = vperm.slane %v1551, %v1558
        %v1560 = vrot.slane %v1488, 4
        %v1561 = vsel %vm293, %v1560, %v1424
        %v1562 = vrot.slane %v1424, 4
        %v1563 = vsel %vm293, %v1488, %v1562
        %v1565 = vunpack.c.l.s4 1983009808
        %v1566 = vunpack.c.0.s8 %v1565
        %v1567 = vperm.slane %v1561, %v1566
        %v1569 = vunpack.c.l.s4 1983009808
        %v1570 = vunpack.c.0.s8 %v1569
        %v1571 = vperm.slane %v1563, %v1570
        %v1572 = vrot.slane %v1520, 4
        %v1573 = vsel %vm293, %v1572, %v1456
        %v1574 = vrot.slane %v1456, 4
        %v1575 = vsel %vm293, %v1520, %v1574
        %v1577 = vunpack.c.l.s4 1983009808
        %v1578 = vunpack.c.0.s8 %v1577
        %v1579 = vperm.slane %v1573, %v1578
        %v1581 = vunpack.c.l.s4 1983009808
        %v1582 = vunpack.c.0.s8 %v1581
        %v1583 = vperm.slane %v1575, %v1582
        %v1584 = vrot.slane %v1555, 4
        %v1585 = vsel %vm293, %v1584, %v1543
        %v1586 = vrot.slane %v1543, 4
        %v1587 = vsel %vm293, %v1555, %v1586
        %v1589 = vunpack.c.l.s4 1934713408
        %v1590 = vunpack.c.0.s8 %v1589
        %v1591 = vperm.slane %v1585, %v1590
        %v1593 = vunpack.c.l.s4 1934713408
        %v1594 = vunpack.c.0.s8 %v1593
        %v1595 = vperm.slane %v1587, %v1594
        %v1596 = vrot.slane %v1559, 4
        %v1597 = vsel %vm293, %v1596, %v1547
        %v1598 = vrot.slane %v1547, 4
        %v1599 = vsel %vm293, %v1559, %v1598
        %v1601 = vunpack.c.l.s4 1934713408
        %v1602 = vunpack.c.0.s8 %v1601
        %v1603 = vperm.slane %v1597, %v1602
        %v1605 = vunpack.c.l.s4 1934713408
        %v1606 = vunpack.c.0.s8 %v1605
        %v1607 = vperm.slane %v1599, %v1606
        %v1608 = vrot.slane %v1579, 4
        %v1609 = vsel %vm293, %v1608, %v1567
        %v1610 = vrot.slane %v1567, 4
        %v1611 = vsel %vm293, %v1579, %v1610
        %v1613 = vunpack.c.l.s4 1934713408
        %v1614 = vunpack.c.0.s8 %v1613
        %v1615 = vperm.slane %v1609, %v1614
        %v1617 = vunpack.c.l.s4 1934713408
        %v1618 = vunpack.c.0.s8 %v1617
        %v1619 = vperm.slane %v1611, %v1618
        %v1620 = vrot.slane %v1583, 4
        %v1621 = vsel %vm293, %v1620, %v1571
        %v1622 = vrot.slane %v1571, 4
        %v1623 = vsel %vm293, %v1583, %v1622
        %v1625 = vunpack.c.l.s4 1934713408
        %v1626 = vunpack.c.0.s8 %v1625
        %v1627 = vperm.slane %v1621, %v1626
        %v1629 = vunpack.c.l.s4 1934713408
        %v1630 = vunpack.c.0.s8 %v1629
        %v1631 = vperm.slane %v1623, %v1630
        %v1632 = vrot.slane %v1615, 4
        %v1633 = vsel %vm293, %v1632, %v1591
        %v1634 = vrot.slane %v1591, 4
        %v1635 = vsel %vm293, %v1615, %v1634
        %v1636 = vrot.slane %v1619, 4
        %v1637 = vsel %vm293, %v1636, %v1595
        %v1638 = vrot.slane %v1595, 4
        %v1639 = vsel %vm293, %v1619, %v1638
        %v1640 = vrot.slane %v1627, 4
        %v1641 = vsel %vm293, %v1640, %v1603
        %v1642 = vrot.slane %v1603, 4
        %v1643 = vsel %vm293, %v1627, %v1642
        %v1644 = vrot.slane %v1631, 4
        %v1645 = vsel %vm293, %v1644, %v1607
        %v1646 = vrot.slane %v1607, 4
        %v1647 = vsel %vm293, %v1631, %v1646
        %1648 = vxpose.xlu0.b32.start [1/16] %v1633, 128
        %1649 = vxpose.xlu0.b32.cont [2/16] 0.0, 128
        %1650 = vxpose.xlu0.b32.cont [3/16] 0.0, 128
        %1651 = vxpose.xlu0.b32.cont [4/16] 0.0, 128
        %1652 = vxpose.xlu0.b32.cont [5/16] 0.0, 128
        %1653 = vxpose.xlu0.b32.cont [6/16] 0.0, 128
        %1654 = vxpose.xlu0.b32.cont [7/16] 0.0, 128
        %1655 = vxpose.xlu0.b32.cont [8/16] 0.0, 128
        %1656 = vxpose.xlu0.b32.cont [9/16] 0.0, 128
        %1657 = vxpose.xlu0.b32.cont [10/16] 0.0, 128
        %1658 = vxpose.xlu0.b32.cont [11/16] 0.0, 128
        %1659 = vxpose.xlu0.b32.cont [12/16] 0.0, 128
        %1660 = vxpose.xlu0.b32.cont [13/16] 0.0, 128
        %1661 = vxpose.xlu0.b32.cont [14/16] 0.0, 128
        %1662 = vxpose.xlu0.b32.cont [15/16] 0.0, 128
        %1663 = vxpose.xlu0.b32.end [16/16] 0.0, 128
        %v1664 = vpop.trf.xlu0
        %v1665 = vpop.trf.xlu0
        %v1666 = vpop.trf.xlu0
        %v1667 = vpop.trf.xlu0
        %v1668 = vpop.trf.xlu0
        %v1669 = vpop.trf.xlu0
        %v1670 = vpop.trf.xlu0
        %v1671 = vpop.trf.xlu0
        %v1672 = vpop.trf.xlu0
        %v1673 = vpop.trf.xlu0
        %v1674 = vpop.trf.xlu0
        %v1675 = vpop.trf.xlu0
        %v1676 = vpop.trf.xlu0
        %v1677 = vpop.trf.xlu0
        %v1678 = vpop.trf.xlu0
        %v1679 = vpop.trf.xlu0
        %1680 = vxpose.xlu0.b32.start [1/16] %v1635, 128
        %1681 = vxpose.xlu0.b32.cont [2/16] 0.0, 128
        %1682 = vxpose.xlu0.b32.cont [3/16] 0.0, 128
        %1683 = vxpose.xlu0.b32.cont [4/16] 0.0, 128
        %1684 = vxpose.xlu0.b32.cont [5/16] 0.0, 128
        %1685 = vxpose.xlu0.b32.cont [6/16] 0.0, 128
        %1686 = vxpose.xlu0.b32.cont [7/16] 0.0, 128
        %1687 = vxpose.xlu0.b32.cont [8/16] 0.0, 128
        %1688 = vxpose.xlu0.b32.cont [9/16] 0.0, 128
        %1689 = vxpose.xlu0.b32.cont [10/16] 0.0, 128
        %1690 = vxpose.xlu0.b32.cont [11/16] 0.0, 128
        %1691 = vxpose.xlu0.b32.cont [12/16] 0.0, 128
        %1692 = vxpose.xlu0.b32.cont [13/16] 0.0, 128
        %1693 = vxpose.xlu0.b32.cont [14/16] 0.0, 128
        %1694 = vxpose.xlu0.b32.cont [15/16] 0.0, 128
        %1695 = vxpose.xlu0.b32.end [16/16] 0.0, 128
        %v1696 = vpop.trf.xlu0
        %v1697 = vpop.trf.xlu0
        %v1698 = vpop.trf.xlu0
        %v1699 = vpop.trf.xlu0
        %v1700 = vpop.trf.xlu0
        %v1701 = vpop.trf.xlu0
        %v1702 = vpop.trf.xlu0
        %v1703 = vpop.trf.xlu0
        %v1704 = vpop.trf.xlu0
        %v1705 = vpop.trf.xlu0
        %v1706 = vpop.trf.xlu0
        %v1707 = vpop.trf.xlu0
        %v1708 = vpop.trf.xlu0
        %v1709 = vpop.trf.xlu0
        %v1710 = vpop.trf.xlu0
        %v1711 = vpop.trf.xlu0
        %1712 = vxpose.xlu0.b32.start [1/16] %v1637, 128
        %1713 = vxpose.xlu0.b32.cont [2/16] 0.0, 128
        %1714 = vxpose.xlu0.b32.cont [3/16] 0.0, 128
        %1715 = vxpose.xlu0.b32.cont [4/16] 0.0, 128
        %1716 = vxpose.xlu0.b32.cont [5/16] 0.0, 128
        %1717 = vxpose.xlu0.b32.cont [6/16] 0.0, 128
        %1718 = vxpose.xlu0.b32.cont [7/16] 0.0, 128
        %1719 = vxpose.xlu0.b32.cont [8/16] 0.0, 128
        %1720 = vxpose.xlu0.b32.cont [9/16] 0.0, 128
        %1721 = vxpose.xlu0.b32.cont [10/16] 0.0, 128
        %1722 = vxpose.xlu0.b32.cont [11/16] 0.0, 128
        %1723 = vxpose.xlu0.b32.cont [12/16] 0.0, 128
        %1724 = vxpose.xlu0.b32.cont [13/16] 0.0, 128
        %1725 = vxpose.xlu0.b32.cont [14/16] 0.0, 128
        %1726 = vxpose.xlu0.b32.cont [15/16] 0.0, 128
        %1727 = vxpose.xlu0.b32.end [16/16] 0.0, 128
        %v1728 = vpop.trf.xlu0
        %v1729 = vpop.trf.xlu0
        %v1730 = vpop.trf.xlu0
        %v1731 = vpop.trf.xlu0
        %v1732 = vpop.trf.xlu0
        %v1733 = vpop.trf.xlu0
        %v1734 = vpop.trf.xlu0
        %v1735 = vpop.trf.xlu0
        %v1736 = vpop.trf.xlu0
        %v1737 = vpop.trf.xlu0
        %v1738 = vpop.trf.xlu0
        %v1739 = vpop.trf.xlu0
        %v1740 = vpop.trf.xlu0
        %v1741 = vpop.trf.xlu0
        %v1742 = vpop.trf.xlu0
        %v1743 = vpop.trf.xlu0
        %1744 = vxpose.xlu0.b32.start [1/16] %v1639, 128
        %1745 = vxpose.xlu0.b32.cont [2/16] 0.0, 128
        %1746 = vxpose.xlu0.b32.cont [3/16] 0.0, 128
        %1747 = vxpose.xlu0.b32.cont [4/16] 0.0, 128
        %1748 = vxpose.xlu0.b32.cont [5/16] 0.0, 128
        %1749 = vxpose.xlu0.b32.cont [6/16] 0.0, 128
        %1750 = vxpose.xlu0.b32.cont [7/16] 0.0, 128
        %1751 = vxpose.xlu0.b32.cont [8/16] 0.0, 128
        %1752 = vxpose.xlu0.b32.cont [9/16] 0.0, 128
        %1753 = vxpose.xlu0.b32.cont [10/16] 0.0, 128
        %1754 = vxpose.xlu0.b32.cont [11/16] 0.0, 128
        %1755 = vxpose.xlu0.b32.cont [12/16] 0.0, 128
        %1756 = vxpose.xlu0.b32.cont [13/16] 0.0, 128
        %1757 = vxpose.xlu0.b32.cont [14/16] 0.0, 128
        %1758 = vxpose.xlu0.b32.cont [15/16] 0.0, 128
        %1759 = vxpose.xlu0.b32.end [16/16] 0.0, 128
        %v1760 = vpop.trf.xlu0
        %v1761 = vpop.trf.xlu0
        %v1762 = vpop.trf.xlu0
        %v1763 = vpop.trf.xlu0
        %v1764 = vpop.trf.xlu0
        %v1765 = vpop.trf.xlu0
        %v1766 = vpop.trf.xlu0
        %v1767 = vpop.trf.xlu0
        %v1768 = vpop.trf.xlu0
        %v1769 = vpop.trf.xlu0
        %v1770 = vpop.trf.xlu0
        %v1771 = vpop.trf.xlu0
        %v1772 = vpop.trf.xlu0
        %v1773 = vpop.trf.xlu0
        %v1774 = vpop.trf.xlu0
        %v1775 = vpop.trf.xlu0
        %1776 = vxpose.xlu0.b32.start [1/16] %v1641, 128
        %1777 = vxpose.xlu0.b32.cont [2/16] 0.0, 128
        %1778 = vxpose.xlu0.b32.cont [3/16] 0.0, 128
        %1779 = vxpose.xlu0.b32.cont [4/16] 0.0, 128
        %1780 = vxpose.xlu0.b32.cont [5/16] 0.0, 128
        %1781 = vxpose.xlu0.b32.cont [6/16] 0.0, 128
        %1782 = vxpose.xlu0.b32.cont [7/16] 0.0, 128
        %1783 = vxpose.xlu0.b32.cont [8/16] 0.0, 128
        %1784 = vxpose.xlu0.b32.cont [9/16] 0.0, 128
        %1785 = vxpose.xlu0.b32.cont [10/16] 0.0, 128
        %1786 = vxpose.xlu0.b32.cont [11/16] 0.0, 128
        %1787 = vxpose.xlu0.b32.cont [12/16] 0.0, 128
        %1788 = vxpose.xlu0.b32.cont [13/16] 0.0, 128
        %1789 = vxpose.xlu0.b32.cont [14/16] 0.0, 128
        %1790 = vxpose.xlu0.b32.cont [15/16] 0.0, 128
        %1791 = vxpose.xlu0.b32.end [16/16] 0.0, 128
        %v1792 = vpop.trf.xlu0
        %v1793 = vpop.trf.xlu0
        %v1794 = vpop.trf.xlu0
        %v1795 = vpop.trf.xlu0
        %v1796 = vpop.trf.xlu0
        %v1797 = vpop.trf.xlu0
        %v1798 = vpop.trf.xlu0
        %v1799 = vpop.trf.xlu0
        %v1800 = vpop.trf.xlu0
        %v1801 = vpop.trf.xlu0
        %v1802 = vpop.trf.xlu0
        %v1803 = vpop.trf.xlu0
        %v1804 = vpop.trf.xlu0
        %v1805 = vpop.trf.xlu0
        %v1806 = vpop.trf.xlu0
        %v1807 = vpop.trf.xlu0
        %1808 = vxpose.xlu0.b32.start [1/16] %v1643, 128
        %1809 = vxpose.xlu0.b32.cont [2/16] 0.0, 128
        %1810 = vxpose.xlu0.b32.cont [3/16] 0.0, 128
        %1811 = vxpose.xlu0.b32.cont [4/16] 0.0, 128
        %1812 = vxpose.xlu0.b32.cont [5/16] 0.0, 128
        %1813 = vxpose.xlu0.b32.cont [6/16] 0.0, 128
        %1814 = vxpose.xlu0.b32.cont [7/16] 0.0, 128
        %1815 = vxpose.xlu0.b32.cont [8/16] 0.0, 128
        %1816 = vxpose.xlu0.b32.cont [9/16] 0.0, 128
        %1817 = vxpose.xlu0.b32.cont [10/16] 0.0, 128
        %1818 = vxpose.xlu0.b32.cont [11/16] 0.0, 128
        %1819 = vxpose.xlu0.b32.cont [12/16] 0.0, 128
        %1820 = vxpose.xlu0.b32.cont [13/16] 0.0, 128
        %1821 = vxpose.xlu0.b32.cont [14/16] 0.0, 128
        %1822 = vxpose.xlu0.b32.cont [15/16] 0.0, 128
        %1823 = vxpose.xlu0.b32.end [16/16] 0.0, 128
        %v1824 = vpop.trf.xlu0
        %v1825 = vpop.trf.xlu0
        %v1826 = vpop.trf.xlu0
        %v1827 = vpop.trf.xlu0
        %v1828 = vpop.trf.xlu0
        %v1829 = vpop.trf.xlu0
        %v1830 = vpop.trf.xlu0
        %v1831 = vpop.trf.xlu0
        %v1832 = vpop.trf.xlu0
        %v1833 = vpop.trf.xlu0
        %v1834 = vpop.trf.xlu0
        %v1835 = vpop.trf.xlu0
        %v1836 = vpop.trf.xlu0
        %v1837 = vpop.trf.xlu0
        %v1838 = vpop.trf.xlu0
        %v1839 = vpop.trf.xlu0
        %1840 = vxpose.xlu0.b32.start [1/16] %v1645, 128
        %1841 = vxpose.xlu0.b32.cont [2/16] 0.0, 128
        %1842 = vxpose.xlu0.b32.cont [3/16] 0.0, 128
        %1843 = vxpose.xlu0.b32.cont [4/16] 0.0, 128
        %1844 = vxpose.xlu0.b32.cont [5/16] 0.0, 128
        %1845 = vxpose.xlu0.b32.cont [6/16] 0.0, 128
        %1846 = vxpose.xlu0.b32.cont [7/16] 0.0, 128
        %1847 = vxpose.xlu0.b32.cont [8/16] 0.0, 128
        %1848 = vxpose.xlu0.b32.cont [9/16] 0.0, 128
        %1849 = vxpose.xlu0.b32.cont [10/16] 0.0, 128
        %1850 = vxpose.xlu0.b32.cont [11/16] 0.0, 128
        %1851 = vxpose.xlu0.b32.cont [12/16] 0.0, 128
        %1852 = vxpose.xlu0.b32.cont [13/16] 0.0, 128
        %1853 = vxpose.xlu0.b32.cont [14/16] 0.0, 128
        %1854 = vxpose.xlu0.b32.cont [15/16] 0.0, 128
        %1855 = vxpose.xlu0.b32.end [16/16] 0.0, 128
        %v1856 = vpop.trf.xlu0
        %v1857 = vpop.trf.xlu0
        %v1858 = vpop.trf.xlu0
        %v1859 = vpop.trf.xlu0
        %v1860 = vpop.trf.xlu0
        %v1861 = vpop.trf.xlu0
        %v1862 = vpop.trf.xlu0
        %v1863 = vpop.trf.xlu0
        %v1864 = vpop.trf.xlu0
        %v1865 = vpop.trf.xlu0
        %v1866 = vpop.trf.xlu0
        %v1867 = vpop.trf.xlu0
        %v1868 = vpop.trf.xlu0
        %v1869 = vpop.trf.xlu0
        %v1870 = vpop.trf.xlu0
        %v1871 = vpop.trf.xlu0
        %1872 = vxpose.xlu0.b32.start [1/16] %v1647, 128
        %1873 = vxpose.xlu0.b32.cont [2/16] 0.0, 128
        %1874 = vxpose.xlu0.b32.cont [3/16] 0.0, 128
        %1875 = vxpose.xlu0.b32.cont [4/16] 0.0, 128
        %1876 = vxpose.xlu0.b32.cont [5/16] 0.0, 128
        %1877 = vxpose.xlu0.b32.cont [6/16] 0.0, 128
        %1878 = vxpose.xlu0.b32.cont [7/16] 0.0, 128
        %1879 = vxpose.xlu0.b32.cont [8/16] 0.0, 128
        %1880 = vxpose.xlu0.b32.cont [9/16] 0.0, 128
        %1881 = vxpose.xlu0.b32.cont [10/16] 0.0, 128
        %1882 = vxpose.xlu0.b32.cont [11/16] 0.0, 128
        %1883 = vxpose.xlu0.b32.cont [12/16] 0.0, 128
        %1884 = vxpose.xlu0.b32.cont [13/16] 0.0, 128
        %1885 = vxpose.xlu0.b32.cont [14/16] 0.0, 128
        %1886 = vxpose.xlu0.b32.cont [15/16] 0.0, 128
        %1887 = vxpose.xlu0.b32.end [16/16] 0.0, 128
        %v1888 = vpop.trf.xlu0
        %v1889 = vpop.trf.xlu0
        %v1890 = vpop.trf.xlu0
        %v1891 = vpop.trf.xlu0
        %v1892 = vpop.trf.xlu0
        %v1893 = vpop.trf.xlu0
        %v1894 = vpop.trf.xlu0
        %v1895 = vpop.trf.xlu0
        %v1896 = vpop.trf.xlu0
        %v1897 = vpop.trf.xlu0
        %v1898 = vpop.trf.xlu0
        %v1899 = vpop.trf.xlu0
        %v1900 = vpop.trf.xlu0
        %v1901 = vpop.trf.xlu0
        %v1902 = vpop.trf.xlu0
        %v1903 = vpop.trf.xlu0
        %v1904 = vrot.slane %v1728, 4
        %v1905 = vsel %vm293, %v1904, %v1664
        %v1907 = vunpack.c.l.s4 1983009808
        %v1908 = vunpack.c.0.s8 %v1907
        %v1909 = vperm.slane %v1905, %v1908
        %v1910 = vrot.slane %v1760, 4
        %v1911 = vsel %vm293, %v1910, %v1696
        %v1913 = vunpack.c.l.s4 1983009808
        %v1914 = vunpack.c.0.s8 %v1913
        %v1915 = vperm.slane %v1911, %v1914
        %v1916 = vrot.slane %v1856, 4
        %v1917 = vsel %vm293, %v1916, %v1792
        %v1919 = vunpack.c.l.s4 1983009808
        %v1920 = vunpack.c.0.s8 %v1919
        %v1921 = vperm.slane %v1917, %v1920
        %v1922 = vrot.slane %v1888, 4
        %v1923 = vsel %vm293, %v1922, %v1824
        %v1925 = vunpack.c.l.s4 1983009808
        %v1926 = vunpack.c.0.s8 %v1925
        %v1927 = vperm.slane %v1923, %v1926
        %v1928 = vrot.slane %v1915, 4
        %v1929 = vsel %vm293, %v1928, %v1909
        %v1930 = vrot.slane %v1909, 4
        %v1931 = vsel %vm293, %v1915, %v1930
        %v1933 = vunpack.c.l.s4 1934713408
        %v1934 = vunpack.c.0.s8 %v1933
        %v1935 = vperm.slane %v1929, %v1934
        %v1937 = vunpack.c.l.s4 1934713408
        %v1938 = vunpack.c.0.s8 %v1937
        %v1939 = vperm.slane %v1931, %v1938
        %v1940 = vrot.slane %v1927, 4
        %v1941 = vsel %vm293, %v1940, %v1921
        %v1942 = vrot.slane %v1921, 4
        %v1943 = vsel %vm293, %v1927, %v1942
        %v1945 = vunpack.c.l.s4 1934713408
        %v1946 = vunpack.c.0.s8 %v1945
        %v1947 = vperm.slane %v1941, %v1946
        %v1949 = vunpack.c.l.s4 1934713408
        %v1950 = vunpack.c.0.s8 %v1949
        %v1951 = vperm.slane %v1943, %v1950
        %v1952 = vrot.slane %v1947, 4
        %v1953 = vsel %vm293, %v1952, %v1935
        %v1954 = vrot.slane %v1935, 4
        %v1955 = vsel %vm293, %v1947, %v1954
        %v1956 = vrot.slane %v1951, 4
        %v1957 = vsel %vm293, %v1956, %v1939
        %v1958 = vrot.slane %v1939, 4
        %v1959 = vsel %vm293, %v1951, %v1958
        %v1961 = vsel %vm1095, %v1953, 0
        %v1964 = vsel %vm1095, %v1276, 0
        %1966 = vmatpush.xpose.msra.mxu0 0.0
        %1967 = vmatpush.xpose.msra.mxu0 0.0
        %1968 = vmatpush.xpose.msra.mxu0 0.0
        %1969 = vmatpush.xpose.msra.mxu0 0.0
        %1970 = vmatpush.xpose.msra.mxu0 0.0
        %1971 = vmatpush.xpose.msra.mxu0 0.0
        %1972 = vmatpush.xpose.msra.mxu0 0.0
        %1973 = vmatpush.xpose.msra.mxu0 0.0
        %1974 = vmatpush.xpose.msra.mxu0 0.0
        %1975 = vmatpush.xpose.msra.mxu0 0.0
        %1976 = vmatpush.xpose.msra.mxu0 0.0
        %1977 = vmatpush.xpose.msra.mxu0 0.0
        %1978 = vmatpush.xpose.msra.mxu0 0.0
        %1979 = vmatpush.xpose.msra.mxu0 0.0
        %1980 = vmatpush.xpose.msra.mxu0 0.0
        %1981 = vmatpush.xpose.msra.mxu0 %v1964
        %1982 = vmatmul.f32.gmra.mxu0 %v1961
        %v1983 = vpop.f32.mrf.mxu0
        %v1984 = vadd.f32 0.0, %v1983
        %1985 = vdwg.mxu0
        %v1987 = vsel %vm1095, %v1955, 0
        %v1990 = vsel %vm1095, %v1277, 0
        %1992 = vmatpush.xpose.msra.mxu0 0.0
        %1993 = vmatpush.xpose.msra.mxu0 0.0
        %1994 = vmatpush.xpose.msra.mxu0 0.0
        %1995 = vmatpush.xpose.msra.mxu0 0.0
        %1996 = vmatpush.xpose.msra.mxu0 0.0
        %1997 = vmatpush.xpose.msra.mxu0 0.0
        %1998 = vmatpush.xpose.msra.mxu0 0.0
        %1999 = vmatpush.xpose.msra.mxu0 0.0
        %2000 = vmatpush.xpose.msra.mxu0 0.0
        %2001 = vmatpush.xpose.msra.mxu0 0.0
        %2002 = vmatpush.xpose.msra.mxu0 0.0
        %2003 = vmatpush.xpose.msra.mxu0 0.0
        %2004 = vmatpush.xpose.msra.mxu0 0.0
        %2005 = vmatpush.xpose.msra.mxu0 0.0
        %2006 = vmatpush.xpose.msra.mxu0 0.0
        %2007 = vmatpush.xpose.msra.mxu0 %v1990
        %2008 = vmatmul.f32.gmra.mxu0 %v1987
        %v2009 = vpop.f32.mrf.mxu0
        %v2010 = vadd.f32 0.0, %v2009
        %2011 = vdwg.mxu0
        %v2013 = vsel %vm1095, %v1957, 0
        %v2016 = vsel %vm1095, %v1278, 0
        %2018 = vmatpush.xpose.msra.mxu0 0.0
        %2019 = vmatpush.xpose.msra.mxu0 0.0
        %2020 = vmatpush.xpose.msra.mxu0 0.0
        %2021 = vmatpush.xpose.msra.mxu0 0.0
        %2022 = vmatpush.xpose.msra.mxu0 0.0
        %2023 = vmatpush.xpose.msra.mxu0 0.0
        %2024 = vmatpush.xpose.msra.mxu0 0.0
        %2025 = vmatpush.xpose.msra.mxu0 0.0
        %2026 = vmatpush.xpose.msra.mxu0 0.0
        %2027 = vmatpush.xpose.msra.mxu0 0.0
        %2028 = vmatpush.xpose.msra.mxu0 0.0
        %2029 = vmatpush.xpose.msra.mxu0 0.0
        %2030 = vmatpush.xpose.msra.mxu0 0.0
        %2031 = vmatpush.xpose.msra.mxu0 0.0
        %2032 = vmatpush.xpose.msra.mxu0 0.0
        %2033 = vmatpush.xpose.msra.mxu0 %v2016
        %2034 = vmatmul.f32.gmra.mxu0 %v2013
        %v2035 = vpop.f32.mrf.mxu0
        %v2036 = vadd.f32 0.0, %v2035
        %2037 = vdwg.mxu0
        %v2039 = vsel %vm1095, %v1959, 0
        %v2042 = vsel %vm1095, %v1279, 0
        %2044 = vmatpush.xpose.msra.mxu0 0.0
        %2045 = vmatpush.xpose.msra.mxu0 0.0
        %2046 = vmatpush.xpose.msra.mxu0 0.0
        %2047 = vmatpush.xpose.msra.mxu0 0.0
        %2048 = vmatpush.xpose.msra.mxu0 0.0
        %2049 = vmatpush.xpose.msra.mxu0 0.0
        %2050 = vmatpush.xpose.msra.mxu0 0.0
        %2051 = vmatpush.xpose.msra.mxu0 0.0
        %2052 = vmatpush.xpose.msra.mxu0 0.0
        %2053 = vmatpush.xpose.msra.mxu0 0.0
        %2054 = vmatpush.xpose.msra.mxu0 0.0
        %2055 = vmatpush.xpose.msra.mxu0 0.0
        %2056 = vmatpush.xpose.msra.mxu0 0.0
        %2057 = vmatpush.xpose.msra.mxu0 0.0
        %2058 = vmatpush.xpose.msra.mxu0 0.0
        %2059 = vmatpush.xpose.msra.mxu0 %v2042
        %2060 = vmatmul.f32.gmra.mxu0 %v2039
        %v2061 = vpop.f32.mrf.mxu0
        %v2062 = vadd.f32 0.0, %v2061
        %2063 = vdwg.mxu0
        %2064 = vxpose.xlu0.b32.start [1/16] %v1984, 128
        %2065 = vxpose.xlu0.b32.cont [2/16] 0.0, 128
        %2066 = vxpose.xlu0.b32.cont [3/16] 0.0, 128
        %2067 = vxpose.xlu0.b32.cont [4/16] 0.0, 128
        %2068 = vxpose.xlu0.b32.cont [5/16] 0.0, 128
        %2069 = vxpose.xlu0.b32.cont [6/16] 0.0, 128
        %2070 = vxpose.xlu0.b32.cont [7/16] 0.0, 128
        %2071 = vxpose.xlu0.b32.cont [8/16] 0.0, 128
        %2072 = vxpose.xlu0.b32.cont [9/16] 0.0, 128
        %2073 = vxpose.xlu0.b32.cont [10/16] 0.0, 128
        %2074 = vxpose.xlu0.b32.cont [11/16] 0.0, 128
        %2075 = vxpose.xlu0.b32.cont [12/16] 0.0, 128
        %2076 = vxpose.xlu0.b32.cont [13/16] 0.0, 128
        %2077 = vxpose.xlu0.b32.cont [14/16] 0.0, 128
        %2078 = vxpose.xlu0.b32.cont [15/16] 0.0, 128
        %2079 = vxpose.xlu0.b32.end [16/16] 0.0, 128
        %v2080 = vpop.trf.xlu0
        %v2081 = vpop.trf.xlu0
        %v2082 = vpop.trf.xlu0
        %v2083 = vpop.trf.xlu0
        %v2084 = vpop.trf.xlu0
        %v2085 = vpop.trf.xlu0
        %v2086 = vpop.trf.xlu0
        %v2087 = vpop.trf.xlu0
        %v2088 = vpop.trf.xlu0
        %v2089 = vpop.trf.xlu0
        %v2090 = vpop.trf.xlu0
        %v2091 = vpop.trf.xlu0
        %v2092 = vpop.trf.xlu0
        %v2093 = vpop.trf.xlu0
        %v2094 = vpop.trf.xlu0
        %v2095 = vpop.trf.xlu0
        %2096 = vxpose.xlu0.b32.start [1/16] %v2010, 128
        %2097 = vxpose.xlu0.b32.cont [2/16] 0.0, 128
        %2098 = vxpose.xlu0.b32.cont [3/16] 0.0, 128
        %2099 = vxpose.xlu0.b32.cont [4/16] 0.0, 128
        %2100 = vxpose.xlu0.b32.cont [5/16] 0.0, 128
        %2101 = vxpose.xlu0.b32.cont [6/16] 0.0, 128
        %2102 = vxpose.xlu0.b32.cont [7/16] 0.0, 128
        %2103 = vxpose.xlu0.b32.cont [8/16] 0.0, 128
        %2104 = vxpose.xlu0.b32.cont [9/16] 0.0, 128
        %2105 = vxpose.xlu0.b32.cont [10/16] 0.0, 128
        %2106 = vxpose.xlu0.b32.cont [11/16] 0.0, 128
        %2107 = vxpose.xlu0.b32.cont [12/16] 0.0, 128
        %2108 = vxpose.xlu0.b32.cont [13/16] 0.0, 128
        %2109 = vxpose.xlu0.b32.cont [14/16] 0.0, 128
        %2110 = vxpose.xlu0.b32.cont [15/16] 0.0, 128
        %2111 = vxpose.xlu0.b32.end [16/16] 0.0, 128
        %v2112 = vpop.trf.xlu0
        %v2113 = vpop.trf.xlu0
        %v2114 = vpop.trf.xlu0
        %v2115 = vpop.trf.xlu0
        %v2116 = vpop.trf.xlu0
        %v2117 = vpop.trf.xlu0
        %v2118 = vpop.trf.xlu0
        %v2119 = vpop.trf.xlu0
        %v2120 = vpop.trf.xlu0
        %v2121 = vpop.trf.xlu0
        %v2122 = vpop.trf.xlu0
        %v2123 = vpop.trf.xlu0
        %v2124 = vpop.trf.xlu0
        %v2125 = vpop.trf.xlu0
        %v2126 = vpop.trf.xlu0
        %v2127 = vpop.trf.xlu0
        %2128 = vxpose.xlu0.b32.start [1/16] %v2036, 128
        %2129 = vxpose.xlu0.b32.cont [2/16] 0.0, 128
        %2130 = vxpose.xlu0.b32.cont [3/16] 0.0, 128
        %2131 = vxpose.xlu0.b32.cont [4/16] 0.0, 128
        %2132 = vxpose.xlu0.b32.cont [5/16] 0.0, 128
        %2133 = vxpose.xlu0.b32.cont [6/16] 0.0, 128
        %2134 = vxpose.xlu0.b32.cont [7/16] 0.0, 128
        %2135 = vxpose.xlu0.b32.cont [8/16] 0.0, 128
        %2136 = vxpose.xlu0.b32.cont [9/16] 0.0, 128
        %2137 = vxpose.xlu0.b32.cont [10/16] 0.0, 128
        %2138 = vxpose.xlu0.b32.cont [11/16] 0.0, 128
        %2139 = vxpose.xlu0.b32.cont [12/16] 0.0, 128
        %2140 = vxpose.xlu0.b32.cont [13/16] 0.0, 128
        %2141 = vxpose.xlu0.b32.cont [14/16] 0.0, 128
        %2142 = vxpose.xlu0.b32.cont [15/16] 0.0, 128
        %2143 = vxpose.xlu0.b32.end [16/16] 0.0, 128
        %v2144 = vpop.trf.xlu0
        %v2145 = vpop.trf.xlu0
        %v2146 = vpop.trf.xlu0
        %v2147 = vpop.trf.xlu0
        %v2148 = vpop.trf.xlu0
        %v2149 = vpop.trf.xlu0
        %v2150 = vpop.trf.xlu0
        %v2151 = vpop.trf.xlu0
        %v2152 = vpop.trf.xlu0
        %v2153 = vpop.trf.xlu0
        %v2154 = vpop.trf.xlu0
        %v2155 = vpop.trf.xlu0
        %v2156 = vpop.trf.xlu0
        %v2157 = vpop.trf.xlu0
        %v2158 = vpop.trf.xlu0
        %v2159 = vpop.trf.xlu0
        %2160 = vxpose.xlu0.b32.start [1/16] %v2062, 128
        %2161 = vxpose.xlu0.b32.cont [2/16] 0.0, 128
        %2162 = vxpose.xlu0.b32.cont [3/16] 0.0, 128
        %2163 = vxpose.xlu0.b32.cont [4/16] 0.0, 128
        %2164 = vxpose.xlu0.b32.cont [5/16] 0.0, 128
        %2165 = vxpose.xlu0.b32.cont [6/16] 0.0, 128
        %2166 = vxpose.xlu0.b32.cont [7/16] 0.0, 128
        %2167 = vxpose.xlu0.b32.cont [8/16] 0.0, 128
        %2168 = vxpose.xlu0.b32.cont [9/16] 0.0, 128
        %2169 = vxpose.xlu0.b32.cont [10/16] 0.0, 128
        %2170 = vxpose.xlu0.b32.cont [11/16] 0.0, 128
        %2171 = vxpose.xlu0.b32.cont [12/16] 0.0, 128
        %2172 = vxpose.xlu0.b32.cont [13/16] 0.0, 128
        %2173 = vxpose.xlu0.b32.cont [14/16] 0.0, 128
        %2174 = vxpose.xlu0.b32.cont [15/16] 0.0, 128
        %2175 = vxpose.xlu0.b32.end [16/16] 0.0, 128
        %v2176 = vpop.trf.xlu0
        %v2177 = vpop.trf.xlu0
        %v2178 = vpop.trf.xlu0
        %v2179 = vpop.trf.xlu0
        %v2180 = vpop.trf.xlu0
        %v2181 = vpop.trf.xlu0
        %v2182 = vpop.trf.xlu0
        %v2183 = vpop.trf.xlu0
        %v2184 = vpop.trf.xlu0
        %v2185 = vpop.trf.xlu0
        %v2186 = vpop.trf.xlu0
        %v2187 = vpop.trf.xlu0
        %v2188 = vpop.trf.xlu0
        %v2189 = vpop.trf.xlu0
        %v2190 = vpop.trf.xlu0
        %v2191 = vpop.trf.xlu0
        %v2192 = vrot.slane %v2144, 4
        %v2193 = vsel %vm293, %v2192, %v2080
        %v2194 = vrot.slane %v2080, 4
        %v2195 = vsel %vm293, %v2144, %v2194
        %v2197 = vunpack.c.l.s4 1983009808
        %v2198 = vunpack.c.0.s8 %v2197
        %v2199 = vperm.slane %v2193, %v2198
        %v2201 = vunpack.c.l.s4 1983009808
        %v2202 = vunpack.c.0.s8 %v2201
        %v2203 = vperm.slane %v2195, %v2202
        %v2204 = vrot.slane %v2176, 4
        %v2205 = vsel %vm293, %v2204, %v2112
        %v2206 = vrot.slane %v2112, 4
        %v2207 = vsel %vm293, %v2176, %v2206
        %v2209 = vunpack.c.l.s4 1983009808
        %v2210 = vunpack.c.0.s8 %v2209
        %v2211 = vperm.slane %v2205, %v2210
        %v2213 = vunpack.c.l.s4 1983009808
        %v2214 = vunpack.c.0.s8 %v2213
        %v2215 = vperm.slane %v2207, %v2214
        %v2216 = vrot.slane %v2211, 4
        %v2217 = vsel %vm293, %v2216, %v2199
        %v2218 = vrot.slane %v2199, 4
        %v2219 = vsel %vm293, %v2211, %v2218
        %v2221 = vunpack.c.l.s4 1934713408
        %v2222 = vunpack.c.0.s8 %v2221
        %v2223 = vperm.slane %v2217, %v2222
        %v2225 = vunpack.c.l.s4 1934713408
        %v2226 = vunpack.c.0.s8 %v2225
        %v2227 = vperm.slane %v2219, %v2226
        %v2228 = vrot.slane %v2215, 4
        %v2229 = vsel %vm293, %v2228, %v2203
        %v2230 = vrot.slane %v2203, 4
        %v2231 = vsel %vm293, %v2215, %v2230
        %v2233 = vunpack.c.l.s4 1934713408
        %v2234 = vunpack.c.0.s8 %v2233
        %v2235 = vperm.slane %v2229, %v2234
        %v2237 = vunpack.c.l.s4 1934713408
        %v2238 = vunpack.c.0.s8 %v2237
        %v2239 = vperm.slane %v2231, %v2238
        %v2240 = vrot.slane %v2223, 4
        %v2241 = vsel %vm293, 0.0, %v2240
        %v2242 = vrot.slane %v2227, 4
        %v2243 = vsel %vm293, 0.0, %v2242
        %v2244 = vrot.slane %v2235, 4
        %v2245 = vsel %vm293, 0.0, %v2244
        %v2246 = vrot.slane %v2239, 4
        %v2247 = vsel %vm293, 0.0, %v2246
        %v2248 = vsel %vm293, %v2242, %v2223
        %v2250 = vunpack.c.l.s4 1983009808
        %v2251 = vunpack.c.0.s8 %v2250
        %v2252 = vperm.slane %v2248, %v2251
        %v2253 = vrot.slane %v2243, 4
        %v2254 = vsel %vm293, %v2253, %v2241
        %v2256 = vunpack.c.l.s4 1983009808
        %v2257 = vunpack.c.0.s8 %v2256
        %v2258 = vperm.slane %v2254, %v2257
        %v2259 = vsel %vm293, %v2246, %v2235
        %v2261 = vunpack.c.l.s4 1983009808
        %v2262 = vunpack.c.0.s8 %v2261
        %v2263 = vperm.slane %v2259, %v2262
        %v2264 = vrot.slane %v2247, 4
        %v2265 = vsel %vm293, %v2264, %v2245
        %v2267 = vunpack.c.l.s4 1983009808
        %v2268 = vunpack.c.0.s8 %v2267
        %v2269 = vperm.slane %v2265, %v2268
        %v2270 = vrot.slane %v2258, 4
        %v2271 = vsel %vm293, %v2270, %v2252
        %v2272 = vrot.slane %v2252, 4
        %v2273 = vsel %vm293, %v2258, %v2272
        %v2275 = vunpack.c.l.s4 1934713408
        %v2276 = vunpack.c.0.s8 %v2275
        %v2277 = vperm.slane %v2271, %v2276
        %v2279 = vunpack.c.l.s4 1934713408
        %v2280 = vunpack.c.0.s8 %v2279
        %v2281 = vperm.slane %v2273, %v2280
        %v2282 = vrot.slane %v2269, 4
        %v2283 = vsel %vm293, %v2282, %v2263
        %v2284 = vrot.slane %v2263, 4
        %v2285 = vsel %vm293, %v2269, %v2284
        %v2287 = vunpack.c.l.s4 1934713408
        %v2288 = vunpack.c.0.s8 %v2287
        %v2289 = vperm.slane %v2283, %v2288
        %v2291 = vunpack.c.l.s4 1934713408
        %v2292 = vunpack.c.0.s8 %v2291
        %v2293 = vperm.slane %v2285, %v2292
        %v2294 = vrot.slane %v2289, 4
        %v2295 = vsel %vm293, %v2294, %v2277
        %v2296 = vrot.slane %v2277, 4
        %v2297 = vsel %vm293, %v2289, %v2296
        %v2298 = vrot.slane %v2293, 4
        %v2299 = vsel %vm293, %v2298, %v2281
        %v2300 = vrot.slane %v2281, 4
        %v2301 = vsel %vm293, %v2293, %v2300
        %2303 = vrot.lane.b32.xlu0 %v2297, 8
        %v2304 = vpop.permute.xlu0 %2303
        %2307 = vrot.lane.b32.xlu0 %v2299, 16
        %v2308 = vpop.permute.xlu0 %2307
        %2311 = vrot.lane.b32.xlu0 %v2301, 24
        %v2312 = vpop.permute.xlu0 %2311
        %v2314 = vsel %vm1095, %v2295, %v2304
        %vm2315 = vcmask 130048
        %v2316 = vsel %vm2315, %v2314, %v2308
        %vm2317 = vcmask 195584
        %v2318 = vsel %vm2317, %v2316, %v2312
        %vm2319 = vcmask 261120
        %2320 = vst.msk [vmem:[%s270] sm:$0xff] %vm2319, %v2318
        %v2321 = vsel %vm1095, %v1276, 0.0
        %v2322 = vsel %vm1095, %v1277, 0.0
        %v2323 = vadd.f32 %v2321, %v2322
        %v2324 = vsel %vm1095, %v1278, 0.0
        %v2325 = vadd.f32 %v2323, %v2324
        %v2326 = vsel %vm1095, %v1279, 0.0
        %v2327 = vadd.f32 %v2325, %v2326
        %v2328 = vmul.f32 %v2327, 0.25
        %2329 = vst.msk [vmem:[%s248] sm:$0xff] %vm1095, %v2328
        %p2330 = scmp.lt.s32.totalorder %s23, 1
        %s2331 = scalar_select %p2330, %s23, 1
        %p2332 = scmp.lt.s32.totalorder %s24, 0
        %s2333 = scalar_select %p2332, %s24, 0
        %s2334 = sadd.s32 %s2333, %s2331
        %s2335 = smul.addr %s2334, 8
        %s2336 = scalar_lea.vmem %s3, %s2335
        %s2337 = sand.u32 %s149, 1
        %s2338 = scalar_lea.sflag [#allocation3], %s2337
        %s2339 = sand.u32 %s149, 1
        %s2340 = smul.addr %s2339, 8
        %s2341 = scalar_lea.vmem [#allocation2], %s2340
        // Predicated region
        $region33: #{_self_attention_impl.8} parent=31 // pred_check
          %p2342 = pneg %p131
        $region34: #{_self_attention_impl.8} parent=31 // pred_check_branch
          %2344 = sbr.rel (%p2342) target = $region36
        $region35: #{_self_attention_impl.8} parent=31 // pred_region
          _
        $region36: #{_self_attention_impl.8} parent=31 // pred_fallthru
          _
        // Predicated region
        $region37: #{_self_attention_impl.8} parent=31 // pred_check
          %p2345 = pneg %p159
        $region38: #{_self_attention_impl.8} parent=31 // pred_check_branch
          %2347 = sbr.rel (%p2345) target = $region40
        $region39: #{_self_attention_impl.8} parent=31 // pred_region
          %2349 = vsyncadd %s2338, 0
          %s2350 = sadd.s32 %s24, %s23
          %s2351 = smul.addr %s2350, 8
          %s2352 = scalar_lea.hbm %s4, %s2351
          %s2354 = sshll.u32 %s2341, 4
          %s2355 = int_to_ptr.vmem [resolvable:$true] %s2354
          %s2356 = sshll.u32 %s2352, 4
          %s2357 = int_to_ptr.hbm [resolvable:$true] %s2356
          %2359 = dma.vmem_to_hbm [thread:$0]  %s2355, 128, %s2357, %s2338
        $region40: #{_self_attention_impl.8} parent=31 // pred_fallthru
          _
      $region32: #{_self_attention_impl.8} parent=5 // pred_fallthru
        _
      %p2360 = scmp.le.s32.totalorder 2, %s14
      // Predicated region
      $region41: #{_self_attention_impl.8} parent=5 // pred_check
        %p2361 = pneg %p2360
      $region42: #{_self_attention_impl.8} parent=5 // pred_check_branch
        %2363 = sbr.rel (%p2361) target = $region44
      $region43: #{_self_attention_impl.8} parent=5 // pred_region
        %s2364 = ssub.s32 %s14, 2
        // Predicated region
        $region45: #{_self_attention_impl.8} parent=43 // pred_check
          %p2365 = pneg %p137
        $region46: #{_self_attention_impl.8} parent=43 // pred_check_branch
          %2367 = sbr.rel (%p2365) target = $region48
        $region47: #{_self_attention_impl.8} parent=43 // pred_region
          %p2368 = scmp.lt.s32.totalorder %s25, 1
          %s2369 = scalar_select %p2368, %s25, 1
          %p2370 = scmp.lt.s32.totalorder %s26, 0
          %s2371 = scalar_select %p2370, %s26, 0
          %s2372 = sadd.s32 %s2371, %s2369
          %s2373 = smul.addr %s2372, 8
          %s2374 = scalar_lea.vmem %s3, %s2373
        $region48: #{_self_attention_impl.8} parent=43 // pred_fallthru
          _
        // Predicated region
        $region49: #{_self_attention_impl.8} parent=43 // pred_check
          %p2375 = pneg %p165
        $region50: #{_self_attention_impl.8} parent=43 // pred_check_branch
          %2377 = sbr.rel (%p2375) target = $region52
        $region51: #{_self_attention_impl.8} parent=43 // pred_region
          %s2378 = sand.u32 %s150, 1
          %s2379 = scalar_lea.sflag [#allocation3], %s2378
          %s2380 = sand.u32 %s150, 1
          %s2381 = smul.addr %s2380, 8
          %s2382 = scalar_lea.vmem [#allocation2], %s2381
          %2384 = dma.done %s2379, 128
        $region52: #{_self_attention_impl.8} parent=43 // pred_fallthru
          _
      $region44: #{_self_attention_impl.8} parent=5 // pred_fallthru
        _
    $region6: #{_self_attention_impl.8} parent=1 // loop_footer
      %s18 = sadd.s32 1, %s14
    $region7: #{_self_attention_impl.8} parent=1 // loop_footer_branch
      %13 = sbr.rel target = $region3
    $region8: #{_self_attention_impl.8} parent=1 // loop_exit
      _
    %2385 = vsyncpa [#allocation3], 1
    %s2386 = scalar_lea.sflag [#allocation3], 1
    %2387 = vsyncpa %s2386, 1

</llo_original>
